<compile_context>
chip_gen: v7x
topology: tpu7x:2x2x1
jax: 0.10.0
libtpu: 0.0.40
codegen_flags: <defaults>
</compile_context>

<pallas_src>
from functools import partial

import jax
import jax.numpy as jnp
from jax.experimental import pallas as pl
from jax.experimental.pallas import tpu as pltpu


def _round_up(x, m):
    return (x + m - 1) // m * m


# ----------------------------- Pallas kernels ------------------------------ #

def _conv_band_relu_kernel(x_ref, w_ref, b_ref, o_ref):
    # x: (tm, Kp) bf16 activation rows, w: (Kp, W*Cout) bf16 banded weights,
    # b: (1, W*Cout) f32.  One MXU GEMM with f32 accumulation + fused bias+ReLU.
    acc = jnp.dot(x_ref[...], w_ref[...], preferred_element_type=jnp.float32)
    o_ref[...] = jnp.maximum(acc + b_ref[...], 0.0)


def _conv_band_relu_pool_kernel(x_ref, w_ref, b_ref,
                                sre_ref, sro_ref, sce_ref, sco_ref,
                                o_ref, p_ref):
    # Same GEMM + bias + ReLU, plus a fused 2x2/stride-2 max pool epilogue.
    # Rows of y are (b, h); cols are (w, c).  The window extraction is done with
    # one-hot selection matmuls (MXU) and elementwise max (VPU) — no strided or
    # unaligned slicing inside the kernel.
    acc = jnp.dot(x_ref[...], w_ref[...], preferred_element_type=jnp.float32)
    y = jnp.maximum(acc + b_ref[...], 0.0)
    o_ref[...] = y
    hmax = jnp.maximum(
        jnp.dot(sre_ref[...], y, preferred_element_type=jnp.float32),   # even h rows
        jnp.dot(sro_ref[...], y, preferred_element_type=jnp.float32))   # odd  h rows
    p_ref[...] = jnp.maximum(
        jnp.dot(hmax, sce_ref[...], preferred_element_type=jnp.float32),  # even w cols
        jnp.dot(hmax, sco_ref[...], preferred_element_type=jnp.float32))  # odd  w cols


def _mse_kernel(a_ref, b_ref, o_ref, acc_ref, *, inv_n):
    # Tiled sum-of-squared-diff with an SMEM scalar accumulator; the mean is
    # finalized into an SMEM (1,1) output on the last grid step.
    @pl.when(pl.program_id(0) == 0)
    def _():
        acc_ref[0, 0] = 0.0

    d = a_ref[...] - b_ref[...]
    acc_ref[0, 0] += jnp.sum(d * d)

    @pl.when(pl.program_id(0) == pl.num_programs(0) - 1)
    def _():
        o_ref[0, 0] = acc_ref[0, 0] * inv_n


# ------------------------------ op wrappers -------------------------------- #

def conv3x3_relu(x_nhwc, w, b, *, pool=False, tm=512):
    """3x3 conv (stride 1, pad 1) + bias + ReLU as a single lane-dense GEMM.

    Returns NHWC features; with pool=True also returns the 2x2/stride-2
    max-pooled features computed in the same pallas_call (fused epilogue).
    """
    B, H, W, Cin = x_nhwc.shape
    Cout = w.shape[-1]
    Wp = W + 2
    N = W * Cout          # lane-dense output width (128 at these sizes)
    M = B * H
    K = 3 * Wp * Cin

    # Activation rows: pad spatially, stack the 3 ky input rows per output row.
    # TODO(synk): the ky stack still materializes a 3x activation copy in HBM;
    # a halo-aware BlockSpec / manual DMA would remove the remaining 3x.
    xp = jnp.pad(x_nhwc, ((0, 0), (1, 1), (1, 1), (0, 0)))
    xr = jnp.stack([xp[:, ky:ky + H] for ky in range(3)], axis=2)   # (B,H,3,Wp,Cin)
    xr = xr.reshape(M, K)

    # Banded weight: fold the 3 kx taps into a (3*Wp*Cin, W*Cout) matrix so the
    # conv is one GEMM with a W*Cout-wide output.
    # band[ky, p, ci, w, co] = sum_kx [p == w + kx] * w[ky, kx, ci, co]
    psel = (jnp.arange(Wp)[:, None, None]
            == jnp.arange(W)[None, :, None] + jnp.arange(3)[None, None, :])
    band = jnp.einsum("pwk,ykio->ypiwo", psel.astype(jnp.float32), w)
    band = band.reshape(K, N)
    bias = jnp.tile(b, W).reshape(1, N).astype(jnp.float32)

    # Pad K to a lane multiple, rows to the tile size; bf16 operands for the MXU.
    Kp = _round_up(K, 128)
    Mp = _round_up(M, 16)
    tm = min(tm, Mp)
    tm = max(16, tm - tm % 16)
    Mp = _round_up(Mp, tm)
    xr = jnp.pad(xr, ((0, Mp - M), (0, Kp - K))).astype(jnp.bfloat16)
    band = jnp.pad(band, ((0, Kp - K), (0, 0))).astype(jnp.bfloat16)

    grid = (Mp // tm,)
    x_spec = pl.BlockSpec((tm, Kp), lambda i: (i, 0))
    w_spec = pl.BlockSpec((Kp, N), lambda i: (0, 0))    # weights resident across grid
    b_spec = pl.BlockSpec((1, N), lambda i: (0, 0))
    o_spec = pl.BlockSpec((tm, N), lambda i: (i, 0))
    cparams = pltpu.CompilerParams(dimension_semantics=("parallel",),
                                   vmem_limit_bytes=32 * 1024 * 1024)

    if not pool:
        out = pl.pallas_call(
            _conv_band_relu_kernel,
            out_shape=jax.ShapeDtypeStruct((Mp, N), jnp.float32),
            grid=grid,
            in_specs=[x_spec, w_spec, b_spec],
            out_specs=o_spec,
            compiler_params=cparams,
        )(xr, band, bias)
        return out[:M].reshape(B, H, W, Cout)

    assert H % 2 == 0 and W % 2 == 0 and tm % 2 == 0
    # One-hot selection matrices for the fused 2x2 max pool (tiny constants).
    ri = jnp.arange(tm // 2)[:, None]
    ci = jnp.arange(tm)[None, :]
    sr_e = (ci == 2 * ri).astype(jnp.float32)            # (tm/2, tm)
    sr_o = (ci == 2 * ri + 1).astype(jnp.float32)
    wi = jnp.arange(N)[:, None]
    oi = jnp.arange(N // 2)[None, :]
    same_c = (wi % Cout) == (oi % Cout)
    sc_e = (same_c & ((wi // Cout) == 2 * (oi // Cout))).astype(jnp.float32)      # (N, N/2)
    sc_o = (same_c & ((wi // Cout) == 2 * (oi // Cout) + 1)).astype(jnp.float32)

    full = lambda shape: pl.BlockSpec(shape, lambda i: (0, 0))
    feat, pooled = pl.pallas_call(
        _conv_band_relu_pool_kernel,
        out_shape=(jax.ShapeDtypeStruct((Mp, N), jnp.float32),
                   jax.ShapeDtypeStruct((Mp // 2, N // 2), jnp.float32)),
        grid=grid,
        in_specs=[x_spec, w_spec, b_spec,
                  full((tm // 2, tm)), full((tm // 2, tm)),
                  full((N, N // 2)), full((N, N // 2))],
        out_specs=(o_spec, pl.BlockSpec((tm // 2, N // 2), lambda i: (i, 0))),
        compiler_params=cparams,
    )(xr, band, bias, sr_e, sr_o, sc_e, sc_o)
    feat = feat[:M].reshape(B, H, W, Cout)
    pooled = pooled[:M // 2].reshape(B, H // 2, W // 2, Cout)
    return feat, pooled


def mse_between_halves(feat_nhwc):
    """nn.MSELoss() (mean) between the first and second batch halves of one feature map."""
    Bt, H, W, C = feat_nhwc.shape
    Bh = Bt // 2
    R = Bh * H                       # rows per half, multiple of 8 by construction
    N = W * C
    f2d = feat_nhwc.reshape(Bt * H, N)
    tr = min(256, R)
    if R % tr:
        tr = 8
    nb_half = R // tr
    inv_n = 1.0 / float(R * N)

    out = pl.pallas_call(
        partial(_mse_kernel, inv_n=inv_n),
        out_shape=jax.ShapeDtypeStruct((1, 1), jnp.float32),
        grid=(nb_half,),
        # Both specs read the SAME array: block i of the output half and the
        # matching block of the target half -> no XLA-side slicing/copies.
        in_specs=[pl.BlockSpec((tr, N), lambda i: (i, 0)),
                  pl.BlockSpec((tr, N), lambda i: (i + nb_half, 0))],
        out_specs=pl.BlockSpec(memory_space=pltpu.MemorySpace.SMEM),
        scratch_shapes=[pltpu.SMEM((1, 1), jnp.float32)],
        compiler_params=pltpu.CompilerParams(dimension_semantics=("arbitrary",)),
    )(f2d, f2d)
    return out[0, 0]


# --------------------- synthetic VGG-style feature extractor ---------------- #

def init_params():
    """Deterministic synthetic conv weights (VGG-like 3x3 convs)."""
    keys = jax.random.split(jax.random.PRNGKey(42), 6)

    def conv_init(kw, kb, cin, cout):
        w = jax.random.normal(kw, (3, 3, cin, cout), jnp.float32) / jnp.sqrt(9.0 * cin)
        b = 0.01 * jax.random.normal(kb, (cout,), jnp.float32)
        return w, b

    return {
        "conv1_1": conv_init(keys[0], keys[1], 3, 8),
        "conv1_2": conv_init(keys[2], keys[3], 8, 8),
        "conv2_1": conv_init(keys[4], keys[5], 8, 16),
    }


def vgg_features_batched(params, x_nchw):
    """VGG-slice feature maps for a batch that already contains output+target images."""
    x = jnp.transpose(x_nchw, (0, 2, 3, 1)).astype(jnp.float32)   # NCHW -> NHWC (glue)
    w, b = params["conv1_1"]
    x = conv3x3_relu(x, w, b)
    w, b = params["conv1_2"]
    f1, x = conv3x3_relu(x, w, b, pool=True)   # "relu1_2" feature + fused 2x2 max pool
    w, b = params["conv2_1"]
    f2 = conv3x3_relu(x, w, b)                 # "relu2_1" feature
    return [f1, f2]


def perceptual_loss(params, output_images, target_images):
    """Matches PerceptualLoss.forward: sum of MSE over corresponding feature maps."""
    both = jnp.concatenate([output_images, target_images], axis=0)   # one batched pass
    feats = vgg_features_batched(params, both)
    loss = jnp.float32(0.0)
    for f in feats:
        loss = loss + mse_between_halves(f)
    return loss


# ---------------------------------- main ------------------------------------ #

if __name__ == "__main__":
    key = jax.random.PRNGKey(0)
    k1, k2 = jax.random.split(key)
    # NCHW like the PyTorch module: batch=2, 3-channel "RGB" images, 16x16 spatial.
    output_images = jax.random.normal(k1, (2, 3, 16, 16), jnp.float32)
    target_images = jax.random.normal(k2, (2, 3, 16, 16), jnp.float32)

    params = init_params()
    loss_fn = jax.jit(partial(perceptual_loss, params))
    loss = loss_fn(output_images, target_images)
    jax.block_until_ready(loss)
    assert loss.shape == () and bool(jnp.isfinite(loss))
    print("KERNEL_OK")
</pallas_src>

<mosaic_0001>
module attributes {stable_mosaic.version = 11 : i64} {
  func.func @_conv_band_relu_kernel(%arg0: i32, %arg1: memref<64x256xbf16, #tpu.memory_space<vmem>>, %arg2: memref<256x128xbf16, #tpu.memory_space<vmem>>, %arg3: memref<1x128xf32, #tpu.memory_space<vmem>>, %arg4: memref<64x128xf32, #tpu.memory_space<vmem>>) attributes {dimension_semantics = [#tpu.dimension_semantics<parallel>], iteration_bounds = array<i64: 1>, scalar_prefetch = 0 : i64, scratch_operands = 0 : i64, tpu.core_type = #tpu.core_type<tc>, window_params = [{transform_indices = @transform_0, window_bounds = array<i64: 64, 256>}, {pipeline_mode = #tpu.pipeline_mode<synchronous>, transform_indices = @transform_1, window_bounds = array<i64: 256, 128>}, {pipeline_mode = #tpu.pipeline_mode<synchronous>, transform_indices = @transform_2, window_bounds = array<i64: 1, 128>}, {transform_indices = @transform_3, window_bounds = array<i64: 64, 128>}]} {
    %c0 = arith.constant 0 : index
    %c0_0 = arith.constant 0 : index
    %0 = vector.load %arg1[%c0, %c0_0] : memref<64x256xbf16, #tpu.memory_space<vmem>>, vector<64x256xbf16>
    %c0_1 = arith.constant 0 : index
    %c0_2 = arith.constant 0 : index
    %1 = vector.load %arg2[%c0_1, %c0_2] : memref<256x128xbf16, #tpu.memory_space<vmem>>, vector<256x128xbf16>
    %cst = arith.constant dense<0.000000e+00> : vector<64x128xf32>
    %2 = tpu.matmul %0, %1, %cst {dimension_numbers = #tpu.dot_dimension_numbers<[1], [0], [0], [1], [0, 0, 1, 1], [], []>} : vector<64x256xbf16>, vector<256x128xbf16>, vector<64x128xf32> -> vector<64x128xf32>
    %c0_3 = arith.constant 0 : index
    %c0_4 = arith.constant 0 : index
    %3 = vector.load %arg3[%c0_3, %c0_4] : memref<1x128xf32, #tpu.memory_space<vmem>>, vector<1x128xf32>
    %4 = vector.broadcast %3 : vector<1x128xf32> to vector<64x128xf32>
    %5 = arith.addf %2, %4 : vector<64x128xf32>
    %cst_5 = arith.constant 0.000000e+00 : f32
    %6 = vector.broadcast %cst_5 : f32 to vector<64x128xf32>
    %7 = arith.maximumf %5, %6 : vector<64x128xf32>
    %c0_6 = arith.constant 0 : index
    %c0_7 = arith.constant 0 : index
    %8 = vector.load %arg4[%c0_6, %c0_7] : memref<64x128xf32, #tpu.memory_space<vmem>>, vector<64x128xf32>
    tpu.vector_store %arg4[%c0_6, %c0_7], %7 {strides = array<i32>} : memref<64x128xf32, #tpu.memory_space<vmem>>, vector<64x128xf32>,
    return
  }
  func.func @transform_0(%arg0: i32) -> (i32, i32) {
    %c0_i32 = arith.constant 0 : i32
    %c0_i32_0 = arith.constant 0 : i32
    return %arg0, %c0_i32 : i32, i32
  }
  func.func @transform_1(%arg0: i32) -> (i32, i32) {
    %c0_i32 = arith.constant 0 : i32
    %c0_i32_0 = arith.constant 0 : i32
    %c0_i32_1 = arith.constant 0 : i32
    return %c0_i32, %c0_i32_0 : i32, i32
  }
  func.func @transform_2(%arg0: i32) -> (i32, i32) {
    %c0_i32 = arith.constant 0 : i32
    %c0_i32_0 = arith.constant 0 : i32
    %c0_i32_1 = arith.constant 0 : i32
    return %c0_i32, %c0_i32_0 : i32, i32
  }
  func.func @transform_3(%arg0: i32) -> (i32, i32) {
    %c0_i32 = arith.constant 0 : i32
    %c0_i32_0 = arith.constant 0 : i32
    return %arg0, %c0_i32 : i32, i32
  }
}

module attributes {stable_mosaic.version = 11 : i64} {
  func.func @_conv_band_relu_pool_kernel(%arg0: i32, %arg1: memref<64x512xbf16, #tpu.memory_space<vmem>>, %arg2: memref<512x128xbf16, #tpu.memory_space<vmem>>, %arg3: memref<1x128xf32, #tpu.memory_space<vmem>>, %arg4: memref<32x64xf32, #tpu.memory_space<vmem>>, %arg5: memref<32x64xf32, #tpu.memory_space<vmem>>, %arg6: memref<128x64xf32, #tpu.memory_space<vmem>>, %arg7: memref<128x64xf32, #tpu.memory_space<vmem>>, %arg8: memref<64x128xf32, #tpu.memory_space<vmem>>, %arg9: memref<32x64xf32, #tpu.memory_space<vmem>>) attributes {dimension_semantics = [#tpu.dimension_semantics<parallel>], iteration_bounds = array<i64: 1>, scalar_prefetch = 0 : i64, scratch_operands = 0 : i64, tpu.core_type = #tpu.core_type<tc>, window_params = [{transform_indices = @transform_0, window_bounds = array<i64: 64, 512>}, {pipeline_mode = #tpu.pipeline_mode<synchronous>, transform_indices = @transform_1, window_bounds = array<i64: 512, 128>}, {pipeline_mode = #tpu.pipeline_mode<synchronous>, transform_indices = @transform_2, window_bounds = array<i64: 1, 128>}, {pipeline_mode = #tpu.pipeline_mode<synchronous>, transform_indices = @transform_3, window_bounds = array<i64: 32, 64>}, {pipeline_mode = #tpu.pipeline_mode<synchronous>, transform_indices = @transform_4, window_bounds = array<i64: 32, 64>}, {pipeline_mode = #tpu.pipeline_mode<synchronous>, transform_indices = @transform_5, window_bounds = array<i64: 128, 64>}, {pipeline_mode = #tpu.pipeline_mode<synchronous>, transform_indices = @transform_6, window_bounds = array<i64: 128, 64>}, {transform_indices = @transform_7, window_bounds = array<i64: 64, 128>}, {transform_indices = @transform_8, window_bounds = array<i64: 32, 64>}]} {
    %c0 = arith.constant 0 : index
    %c0_0 = arith.constant 0 : index
    %0 = vector.load %arg1[%c0, %c0_0] : memref<64x512xbf16, #tpu.memory_space<vmem>>, vector<64x512xbf16>
    %c0_1 = arith.constant 0 : index
    %c0_2 = arith.constant 0 : index
    %1 = vector.load %arg2[%c0_1, %c0_2] : memref<512x128xbf16, #tpu.memory_space<vmem>>, vector<512x128xbf16>
    %cst = arith.constant dense<0.000000e+00> : vector<64x128xf32>
    %2 = tpu.matmul %0, %1, %cst {dimension_numbers = #tpu.dot_dimension_numbers<[1], [0], [0], [1], [0, 0, 1, 1], [], []>} : vector<64x512xbf16>, vector<512x128xbf16>, vector<64x128xf32> -> vector<64x128xf32>
    %c0_3 = arith.constant 0 : index
    %c0_4 = arith.constant 0 : index
    %3 = vector.load %arg3[%c0_3, %c0_4] : memref<1x128xf32, #tpu.memory_space<vmem>>, vector<1x128xf32>
    %4 = vector.broadcast %3 : vector<1x128xf32> to vector<64x128xf32>
    %5 = arith.addf %2, %4 : vector<64x128xf32>
    %cst_5 = arith.constant 0.000000e+00 : f32
    %6 = vector.broadcast %cst_5 : f32 to vector<64x128xf32>
    %7 = arith.maximumf %5, %6 : vector<64x128xf32>
    %c0_6 = arith.constant 0 : index
    %c0_7 = arith.constant 0 : index
    %8 = vector.load %arg8[%c0_6, %c0_7] : memref<64x128xf32, #tpu.memory_space<vmem>>, vector<64x128xf32>
    tpu.vector_store %arg8[%c0_6, %c0_7], %7 {strides = array<i32>} : memref<64x128xf32, #tpu.memory_space<vmem>>, vector<64x128xf32>,
    %c0_8 = arith.constant 0 : index
    %c0_9 = arith.constant 0 : index
    %9 = vector.load %arg4[%c0_8, %c0_9] : memref<32x64xf32, #tpu.memory_space<vmem>>, vector<32x64xf32>
    %cst_10 = arith.constant dense<0.000000e+00> : vector<32x128xf32>
    %10 = tpu.matmul %9, %7, %cst_10 {dimension_numbers = #tpu.dot_dimension_numbers<[1], [0], [0], [1], [0, 0, 1, 1], [], []>} : vector<32x64xf32>, vector<64x128xf32>, vector<32x128xf32> -> vector<32x128xf32>
    %c0_11 = arith.constant 0 : index
    %c0_12 = arith.constant 0 : index
    %11 = vector.load %arg5[%c0_11, %c0_12] : memref<32x64xf32, #tpu.memory_space<vmem>>, vector<32x64xf32>
    %cst_13 = arith.constant dense<0.000000e+00> : vector<32x128xf32>
    %12 = tpu.matmul %11, %7, %cst_13 {dimension_numbers = #tpu.dot_dimension_numbers<[1], [0], [0], [1], [0, 0, 1, 1], [], []>} : vector<32x64xf32>, vector<64x128xf32>, vector<32x128xf32> -> vector<32x128xf32>
    %13 = arith.maximumf %10, %12 : vector<32x128xf32>
    %c0_14 = arith.constant 0 : index
    %c0_15 = arith.constant 0 : index
    %14 = vector.load %arg6[%c0_14, %c0_15] : memref<128x64xf32, #tpu.memory_space<vmem>>, vector<128x64xf32>
    %cst_16 = arith.constant dense<0.000000e+00> : vector<32x64xf32>
    %15 = tpu.matmul %13, %14, %cst_16 {dimension_numbers = #tpu.dot_dimension_numbers<[1], [0], [0], [1], [0, 0, 1, 1], [], []>} : vector<32x128xf32>, vector<128x64xf32>, vector<32x64xf32> -> vector<32x64xf32>
    %c0_17 = arith.constant 0 : index
    %c0_18 = arith.constant 0 : index
    %16 = vector.load %arg7[%c0_17, %c0_18] : memref<128x64xf32, #tpu.memory_space<vmem>>, vector<128x64xf32>
    %cst_19 = arith.constant dense<0.000000e+00> : vector<32x64xf32>
    %17 = tpu.matmul %13, %16, %cst_19 {dimension_numbers = #tpu.dot_dimension_numbers<[1], [0], [0], [1], [0, 0, 1, 1], [], []>} : vector<32x128xf32>, vector<128x64xf32>, vector<32x64xf32> -> vector<32x64xf32>
    %18 = arith.maximumf %15, %17 : vector<32x64xf32>
    %c0_20 = arith.constant 0 : index
    %c0_21 = arith.constant 0 : index
    %19 = vector.load %arg9[%c0_20, %c0_21] : memref<32x64xf32, #tpu.memory_space<vmem>>, vector<32x64xf32>
    tpu.vector_store %arg9[%c0_20, %c0_21], %18 {strides = array<i32>} : memref<32x64xf32, #tpu.memory_space<vmem>>, vector<32x64xf32>,
    return
  }
  func.func @transform_0(%arg0: i32) -> (i32, i32) {
    %c0_i32 = arith.constant 0 : i32
    %c0_i32_0 = arith.constant 0 : i32
    return %arg0, %c0_i32 : i32, i32
  }
  func.func @transform_1(%arg0: i32) -> (i32, i32) {
    %c0_i32 = arith.constant 0 : i32
    %c0_i32_0 = arith.constant 0 : i32
    %c0_i32_1 = arith.constant 0 : i32
    return %c0_i32, %c0_i32_0 : i32, i32
  }
  func.func @transform_2(%arg0: i32) -> (i32, i32) {
    %c0_i32 = arith.constant 0 : i32
    %c0_i32_0 = arith.constant 0 : i32
    %c0_i32_1 = arith.constant 0 : i32
    return %c0_i32, %c0_i32_0 : i32, i32
  }
  func.func @transform_3(%arg0: i32) -> (i32, i32) {
    %c0_i32 = arith.constant 0 : i32
    %c0_i32_0 = arith.constant 0 : i32
    %c0_i32_1 = arith.constant 0 : i32
    return %c0_i32, %c0_i32_0 : i32, i32
  }
  func.func @transform_4(%arg0: i32) -> (i32, i32) {
    %c0_i32 = arith.constant 0 : i32
    %c0_i32_0 = arith.constant 0 : i32
    %c0_i32_1 = arith.constant 0 : i32
    return %c0_i32, %c0_i32_0 : i32, i32
  }
  func.func @transform_5(%arg0: i32) -> (i32, i32) {
    %c0_i32 = arith.constant 0 : i32
    %c0_i32_0 = arith.constant 0 : i32
    %c0_i32_1 = arith.constant 0 : i32
    return %c0_i32, %c0_i32_0 : i32, i32
  }
  func.func @transform_6(%arg0: i32) -> (i32, i32) {
    %c0_i32 = arith.constant 0 : i32
    %c0_i32_0 = arith.constant 0 : i32
    %c0_i32_1 = arith.constant 0 : i32
    return %c0_i32, %c0_i32_0 : i32, i32
  }
  func.func @transform_7(%arg0: i32) -> (i32, i32) {
    %c0_i32 = arith.constant 0 : i32
    %c0_i32_0 = arith.constant 0 : i32
    return %arg0, %c0_i32 : i32, i32
  }
  func.func @transform_8(%arg0: i32) -> (i32, i32) {
    %c0_i32 = arith.constant 0 : i32
    %c0_i32_0 = arith.constant 0 : i32
    return %arg0, %c0_i32 : i32, i32
  }
}

module attributes {stable_mosaic.version = 11 : i64} {
  func.func @_mse_kernel(%arg0: i32, %arg1: memref<32x128xf32, #tpu.memory_space<vmem>>, %arg2: memref<32x128xf32, #tpu.memory_space<vmem>>, %arg3: memref<1x1xf32, #tpu.memory_space<smem>>, %arg4: memref<1x1xf32, #tpu.memory_space<smem>>) attributes {dimension_semantics = [#tpu.dimension_semantics<arbitrary>], iteration_bounds = array<i64: 1>, scalar_prefetch = 0 : i64, scratch_operands = 1 : i64, tpu.core_type = #tpu.core_type<tc>, window_params = [{transform_indices = @transform_0, window_bounds = array<i64: 32, 128>}, {transform_indices = @transform_1, window_bounds = array<i64: 32, 128>}, {transform_indices = @transform_2, window_bounds = array<i64: 1, 1>}]} {
    %c0_i32 = arith.constant 0 : i32
    %0 = arith.cmpi eq, %arg0, %c0_i32 : i32
    %1 = arith.extui %0 : i1 to i32
    %c0_i32_0 = arith.constant 0 : i32
    %2 = arith.cmpi ne, %1, %c0_i32_0 : i32
    scf.if %2 {
      %cst_10 = arith.constant 0.000000e+00 : f32
      %c0_11 = arith.constant 0 : index
      %c0_12 = arith.constant 0 : index
      %17 = memref.load %arg4[%c0_11, %c0_12] : memref<1x1xf32, #tpu.memory_space<smem>>
      memref.store %cst_10, %arg4[%c0_11, %c0_12] : memref<1x1xf32, #tpu.memory_space<smem>>
    } else {
    }
    %c0 = arith.constant 0 : index
    %c0_1 = arith.constant 0 : index
    %3 = vector.load %arg1[%c0, %c0_1] : memref<32x128xf32, #tpu.memory_space<vmem>>, vector<32x128xf32>
    %c0_2 = arith.constant 0 : index
    %c0_3 = arith.constant 0 : index
    %4 = vector.load %arg2[%c0_2, %c0_3] : memref<32x128xf32, #tpu.memory_space<vmem>>, vector<32x128xf32>
    %5 = arith.subf %3, %4 : vector<32x128xf32>
    %c0_4 = arith.constant 0 : index
    %c0_5 = arith.constant 0 : index
    %6 = memref.load %arg4[%c0_4, %c0_5] : memref<1x1xf32, #tpu.memory_space<smem>>
    %7 = arith.mulf %5, %5 : vector<32x128xf32>
    %8 = vector.shape_cast %7 : vector<32x128xf32> to vector<1x32x128xf32>
    %cst = arith.constant dense<0.000000e+00> : vector<1xf32>
    %9 = vector.multi_reduction <add>, %8, %cst [1, 2] : vector<1x32x128xf32> to vector<1xf32>
    %10 = vector.shape_cast %9 : vector<1xf32> to vector<1x1x1xf32>
    %11 = vector.extract %10[0, 0, 0] : f32 from vector<1x1x1xf32>
    %12 = arith.addf %6, %11 : f32
    %c0_6 = arith.constant 0 : index
    %c0_7 = arith.constant 0 : index
    %13 = memref.load %arg4[%c0_6, %c0_7] : memref<1x1xf32, #tpu.memory_space<smem>>
    memref.store %12, %arg4[%c0_6, %c0_7] : memref<1x1xf32, #tpu.memory_space<smem>>
    %c0_i32_8 = arith.constant 0 : i32
    %14 = arith.cmpi eq, %arg0, %c0_i32_8 : i32
    %15 = arith.extui %14 : i1 to i32
    %c0_i32_9 = arith.constant 0 : i32
    %16 = arith.cmpi ne, %15, %c0_i32_9 : i32
    scf.if %16 {
      %c0_10 = arith.constant 0 : index
      %c0_11 = arith.constant 0 : index
      %17 = memref.load %arg4[%c0_10, %c0_11] : memref<1x1xf32, #tpu.memory_space<smem>>
      %cst_12 = arith.constant 2.44140625E-4 : f32
      %18 = arith.mulf %17, %cst_12 : f32
      %c0_13 = arith.constant 0 : index
      %c0_14 = arith.constant 0 : index
      %19 = memref.load %arg3[%c0_13, %c0_14] : memref<1x1xf32, #tpu.memory_space<smem>>
      memref.store %18, %arg3[%c0_13, %c0_14] : memref<1x1xf32, #tpu.memory_space<smem>>
    } else {
    }
    return
  }
  func.func @transform_0(%arg0: i32) -> (i32, i32) {
    %c0_i32 = arith.constant 0 : i32
    %c0_i32_0 = arith.constant 0 : i32
    return %arg0, %c0_i32 : i32, i32
  }
  func.func @transform_1(%arg0: i32) -> (i32, i32) {
    %c1_i32 = arith.constant 1 : i32
    %0 = arith.addi %arg0, %c1_i32 : i32
    %c0_i32 = arith.constant 0 : i32
    %c0_i32_0 = arith.constant 0 : i32
    return %0, %c0_i32 : i32, i32
  }
  func.func @transform_2(%arg0: i32) -> (i32, i32) {
    %c0_i32 = arith.constant 0 : i32
    %c0_i32_0 = arith.constant 0 : i32
    %c0_i32_1 = arith.constant 0 : i32
    return %c0_i32, %c0_i32_0 : i32, i32
  }
}

module attributes {stable_mosaic.version = 11 : i64} {
  func.func @_conv_band_relu_kernel(%arg0: i32, %arg1: memref<32x256xbf16, #tpu.memory_space<vmem>>, %arg2: memref<256x128xbf16, #tpu.memory_space<vmem>>, %arg3: memref<1x128xf32, #tpu.memory_space<vmem>>, %arg4: memref<32x128xf32, #tpu.memory_space<vmem>>) attributes {dimension_semantics = [#tpu.dimension_semantics<parallel>], iteration_bounds = array<i64: 1>, scalar_prefetch = 0 : i64, scratch_operands = 0 : i64, tpu.core_type = #tpu.core_type<tc>, window_params = [{transform_indices = @transform_0, window_bounds = array<i64: 32, 256>}, {pipeline_mode = #tpu.pipeline_mode<synchronous>, transform_indices = @transform_1, window_bounds = array<i64: 256, 128>}, {pipeline_mode = #tpu.pipeline_mode<synchronous>, transform_indices = @transform_2, window_bounds = array<i64: 1, 128>}, {transform_indices = @transform_3, window_bounds = array<i64: 32, 128>}]} {
    %c0 = arith.constant 0 : index
    %c0_0 = arith.constant 0 : index
    %0 = vector.load %arg1[%c0, %c0_0] : memref<32x256xbf16, #tpu.memory_space<vmem>>, vector<32x256xbf16>
    %c0_1 = arith.constant 0 : index
    %c0_2 = arith.constant 0 : index
    %1 = vector.load %arg2[%c0_1, %c0_2] : memref<256x128xbf16, #tpu.memory_space<vmem>>, vector<256x128xbf16>
    %cst = arith.constant dense<0.000000e+00> : vector<32x128xf32>
    %2 = tpu.matmul %0, %1, %cst {dimension_numbers = #tpu.dot_dimension_numbers<[1], [0], [0], [1], [0, 0, 1, 1], [], []>} : vector<32x256xbf16>, vector<256x128xbf16>, vector<32x128xf32> -> vector<32x128xf32>
    %c0_3 = arith.constant 0 : index
    %c0_4 = arith.constant 0 : index
    %3 = vector.load %arg3[%c0_3, %c0_4] : memref<1x128xf32, #tpu.memory_space<vmem>>, vector<1x128xf32>
    %4 = vector.broadcast %3 : vector<1x128xf32> to vector<32x128xf32>
    %5 = arith.addf %2, %4 : vector<32x128xf32>
    %cst_5 = arith.constant 0.000000e+00 : f32
    %6 = vector.broadcast %cst_5 : f32 to vector<32x128xf32>
    %7 = arith.maximumf %5, %6 : vector<32x128xf32>
    %c0_6 = arith.constant 0 : index
    %c0_7 = arith.constant 0 : index
    %8 = vector.load %arg4[%c0_6, %c0_7] : memref<32x128xf32, #tpu.memory_space<vmem>>, vector<32x128xf32>
    tpu.vector_store %arg4[%c0_6, %c0_7], %7 {strides = array<i32>} : memref<32x128xf32, #tpu.memory_space<vmem>>, vector<32x128xf32>,
    return
  }
  func.func @transform_0(%arg0: i32) -> (i32, i32) {
    %c0_i32 = arith.constant 0 : i32
    %c0_i32_0 = arith.constant 0 : i32
    return %arg0, %c0_i32 : i32, i32
  }
  func.func @transform_1(%arg0: i32) -> (i32, i32) {
    %c0_i32 = arith.constant 0 : i32
    %c0_i32_0 = arith.constant 0 : i32
    %c0_i32_1 = arith.constant 0 : i32
    return %c0_i32, %c0_i32_0 : i32, i32
  }
  func.func @transform_2(%arg0: i32) -> (i32, i32) {
    %c0_i32 = arith.constant 0 : i32
    %c0_i32_0 = arith.constant 0 : i32
    %c0_i32_1 = arith.constant 0 : i32
    return %c0_i32, %c0_i32_0 : i32, i32
  }
  func.func @transform_3(%arg0: i32) -> (i32, i32) {
    %c0_i32 = arith.constant 0 : i32
    %c0_i32_0 = arith.constant 0 : i32
    return %arg0, %c0_i32 : i32, i32
  }
}

module attributes {stable_mosaic.version = 11 : i64} {
  func.func @_mse_kernel(%arg0: i32, %arg1: memref<16x128xf32, #tpu.memory_space<vmem>>, %arg2: memref<16x128xf32, #tpu.memory_space<vmem>>, %arg3: memref<1x1xf32, #tpu.memory_space<smem>>, %arg4: memref<1x1xf32, #tpu.memory_space<smem>>) attributes {dimension_semantics = [#tpu.dimension_semantics<arbitrary>], iteration_bounds = array<i64: 1>, scalar_prefetch = 0 : i64, scratch_operands = 1 : i64, tpu.core_type = #tpu.core_type<tc>, window_params = [{transform_indices = @transform_0, window_bounds = array<i64: 16, 128>}, {transform_indices = @transform_1, window_bounds = array<i64: 16, 128>}, {transform_indices = @transform_2, window_bounds = array<i64: 1, 1>}]} {
    %c0_i32 = arith.constant 0 : i32
    %0 = arith.cmpi eq, %arg0, %c0_i32 : i32
    %1 = arith.extui %0 : i1 to i32
    %c0_i32_0 = arith.constant 0 : i32
    %2 = arith.cmpi ne, %1, %c0_i32_0 : i32
    scf.if %2 {
      %cst_10 = arith.constant 0.000000e+00 : f32
      %c0_11 = arith.constant 0 : index
      %c0_12 = arith.constant 0 : index
      %17 = memref.load %arg4[%c0_11, %c0_12] : memref<1x1xf32, #tpu.memory_space<smem>>
      memref.store %cst_10, %arg4[%c0_11, %c0_12] : memref<1x1xf32, #tpu.memory_space<smem>>
    } else {
    }
    %c0 = arith.constant 0 : index
    %c0_1 = arith.constant 0 : index
    %3 = vector.load %arg1[%c0, %c0_1] : memref<16x128xf32, #tpu.memory_space<vmem>>, vector<16x128xf32>
    %c0_2 = arith.constant 0 : index
    %c0_3 = arith.constant 0 : index
    %4 = vector.load %arg2[%c0_2, %c0_3] : memref<16x128xf32, #tpu.memory_space<vmem>>, vector<16x128xf32>
    %5 = arith.subf %3, %4 : vector<16x128xf32>
    %c0_4 = arith.constant 0 : index
    %c0_5 = arith.constant 0 : index
    %6 = memref.load %arg4[%c0_4, %c0_5] : memref<1x1xf32, #tpu.memory_space<smem>>
    %7 = arith.mulf %5, %5 : vector<16x128xf32>
    %8 = vector.shape_cast %7 : vector<16x128xf32> to vector<1x16x128xf32>
    %cst = arith.constant dense<0.000000e+00> : vector<1xf32>
    %9 = vector.multi_reduction <add>, %8, %cst [1, 2] : vector<1x16x128xf32> to vector<1xf32>
    %10 = vector.shape_cast %9 : vector<1xf32> to vector<1x1x1xf32>
    %11 = vector.extract %10[0, 0, 0] : f32 from vector<1x1x1xf32>
    %12 = arith.addf %6, %11 : f32
    %c0_6 = arith.constant 0 : index
    %c0_7 = arith.constant 0 : index
    %13 = memref.load %arg4[%c0_6, %c0_7] : memref<1x1xf32, #tpu.memory_space<smem>>
    memref.store %12, %arg4[%c0_6, %c0_7] : memref<1x1xf32, #tpu.memory_space<smem>>
    %c0_i32_8 = arith.constant 0 : i32
    %14 = arith.cmpi eq, %arg0, %c0_i32_8 : i32
    %15 = arith.extui %14 : i1 to i32
    %c0_i32_9 = arith.constant 0 : i32
    %16 = arith.cmpi ne, %15, %c0_i32_9 : i32
    scf.if %16 {
      %c0_10 = arith.constant 0 : index
      %c0_11 = arith.constant 0 : index
      %17 = memref.load %arg4[%c0_10, %c0_11] : memref<1x1xf32, #tpu.memory_space<smem>>
      %cst_12 = arith.constant 4.8828125E-4 : f32
      %18 = arith.mulf %17, %cst_12 : f32
      %c0_13 = arith.constant 0 : index
      %c0_14 = arith.constant 0 : index
      %19 = memref.load %arg3[%c0_13, %c0_14] : memref<1x1xf32, #tpu.memory_space<smem>>
      memref.store %18, %arg3[%c0_13, %c0_14] : memref<1x1xf32, #tpu.memory_space<smem>>
    } else {
    }
    return
  }
  func.func @transform_0(%arg0: i32) -> (i32, i32) {
    %c0_i32 = arith.constant 0 : i32
    %c0_i32_0 = arith.constant 0 : i32
    return %arg0, %c0_i32 : i32, i32
  }
  func.func @transform_1(%arg0: i32) -> (i32, i32) {
    %c1_i32 = arith.constant 1 : i32
    %0 = arith.addi %arg0, %c1_i32 : i32
    %c0_i32 = arith.constant 0 : i32
    %c0_i32_0 = arith.constant 0 : i32
    return %0, %c0_i32 : i32, i32
  }
  func.func @transform_2(%arg0: i32) -> (i32, i32) {
    %c0_i32 = arith.constant 0 : i32
    %c0_i32_0 = arith.constant 0 : i32
    %c0_i32_1 = arith.constant 0 : i32
    return %c0_i32, %c0_i32_0 : i32, i32
  }
}

</mosaic_0001>

<llo_original>
// kernel: tile.14
$region0: #{tile.14}
  #allocation0 [shape = 's32[1]{0}', space=sflag, size = 0x4, scoped, tag = 'scoped memory for tile.14']
  %s0 = inlined_call_operand.vmem [shape: f32[8], index: 0, kind: input, shape index: {}]
  %s1 = inlined_call_operand.vmem [shape: f32[16,8], index: 1, kind: output, shape index: {}]
  // Predicated region
  $region2: #{tile.14} parent=0 // pred_check
    _
  $region3: #{tile.14} parent=0 // pred_check_branch
    %3 = sbr.rel (0) target = $region5
  $region4: #{tile.14} parent=0 // pred_region
    _
  $region5: #{tile.14} parent=0 // pred_fallthru
    _
  %v4 = vld [vmem:[%s0] ss:$0 sm:$0xff]
  %5 = vst [vmem:[%s1] sm:$0xff] %v4
  %s6 = scalar_lea.vmem %s1, 8
  %7 = vst [vmem:[%s6] sm:$0xff] %v4

// kernel: tile.15
$region0: #{tile.15}
  %s0 = inlined_call_operand.vmem [shape: f32[16,8], index: 0, kind: input, shape index: {}]
  %s1 = inlined_call_operand.vmem [shape: f32[1,128], index: 1, kind: output, shape index: {}]
  $region1: #{tile.15} parent=0
    #allocation0 [shape = 'u8[4096]{0}', space=vmem, size = 0x1000, scoped, tag = 'scoped mem for output reshape']
    %v2 = vld [vmem:[%s0] sm:$0x1]
    %vm3 = vcmask 64512
    %4 = vst.msk [vmem:[#allocation0] sm:$0x1] %vm3, %v2
    %s5 = scalar_lea.vmem %s0, 15
    %v6 = vld [vmem:[%s5] sm:$0x1]
    %7 = vrot.lane.b32.xlu0 %v6, 120
    %v8 = vpop.permute.xlu0 %7
    %vm9 = vcmask 1048512
    %10 = vst.msk [vmem:[#allocation0] sm:$0x1] %vm9, %v8
    %s11 = scalar_lea.vmem %s0, 14
    %v12 = vld [vmem:[%s11] sm:$0x1]
    %13 = vrot.lane.b32.xlu0 %v12, 112
    %v14 = vpop.permute.xlu0 %13
    %vm15 = vcmask 982912
    %16 = vst.msk [vmem:[#allocation0] sm:$0x1] %vm15, %v14
    %s17 = scalar_lea.vmem %s0, 13
    %v18 = vld [vmem:[%s17] sm:$0x1]
    %19 = vrot.lane.b32.xlu0 %v18, 104
    %v20 = vpop.permute.xlu0 %19
    %vm21 = vcmask 917312
    %22 = vst.msk [vmem:[#allocation0] sm:$0x1] %vm21, %v20
    %s23 = scalar_lea.vmem %s0, 12
    %v24 = vld [vmem:[%s23] sm:$0x1]
    %25 = vrot.lane.b32.xlu0 %v24, 96
    %v26 = vpop.permute.xlu0 %25
    %vm27 = vcmask 851712
    %28 = vst.msk [vmem:[#allocation0] sm:$0x1] %vm27, %v26
    %s29 = scalar_lea.vmem %s0, 11
    %v30 = vld [vmem:[%s29] sm:$0x1]
    %31 = vrot.lane.b32.xlu0 %v30, 88
    %v32 = vpop.permute.xlu0 %31
    %vm33 = vcmask 786112
    %34 = vst.msk [vmem:[#allocation0] sm:$0x1] %vm33, %v32
    %s35 = scalar_lea.vmem %s0, 10
    %v36 = vld [vmem:[%s35] sm:$0x1]
    %37 = vrot.lane.b32.xlu0 %v36, 80
    %v38 = vpop.permute.xlu0 %37
    %vm39 = vcmask 720512
    %40 = vst.msk [vmem:[#allocation0] sm:$0x1] %vm39, %v38
    %s41 = scalar_lea.vmem %s0, 9
    %v42 = vld [vmem:[%s41] sm:$0x1]
    %43 = vrot.lane.b32.xlu0 %v42, 72
    %v44 = vpop.permute.xlu0 %43
    %vm45 = vcmask 654912
    %46 = vst.msk [vmem:[#allocation0] sm:$0x1] %vm45, %v44
    %s47 = scalar_lea.vmem %s0, 8
    %v48 = vld [vmem:[%s47] sm:$0x1]
    %49 = vrot.lane.b32.xlu0 %v48, 64
    %v50 = vpop.permute.xlu0 %49
    %vm51 = vcmask 589312
    %52 = vst.msk [vmem:[#allocation0] sm:$0x1] %vm51, %v50
    %s53 = scalar_lea.vmem %s0, 7
    %v54 = vld [vmem:[%s53] sm:$0x1]
    %55 = vrot.lane.b32.xlu0 %v54, 56
    %v56 = vpop.permute.xlu0 %55
    %vm57 = vcmask 523712
    %58 = vst.msk [vmem:[#allocation0] sm:$0x1] %vm57, %v56
    %s59 = scalar_lea.vmem %s0, 6
    %v60 = vld [vmem:[%s59] sm:$0x1]
    %61 = vrot.lane.b32.xlu0 %v60, 48
    %v62 = vpop.permute.xlu0 %61
    %vm63 = vcmask 458112
    %64 = vst.msk [vmem:[#allocation0] sm:$0x1] %vm63, %v62
    %s65 = scalar_lea.vmem %s0, 5
    %v66 = vld [vmem:[%s65] sm:$0x1]
    %67 = vrot.lane.b32.xlu0 %v66, 40
    %v68 = vpop.permute.xlu0 %67
    %vm69 = vcmask 392512
    %70 = vst.msk [vmem:[#allocation0] sm:$0x1] %vm69, %v68
    %s71 = scalar_lea.vmem %s0, 4
    %v72 = vld [vmem:[%s71] sm:$0x1]
    %73 = vrot.lane.b32.xlu0 %v72, 32
    %v74 = vpop.permute.xlu0 %73
    %vm75 = vcmask 326912
    %76 = vst.msk [vmem:[#allocation0] sm:$0x1] %vm75, %v74
    %s77 = scalar_lea.vmem %s0, 3
    %v78 = vld [vmem:[%s77] sm:$0x1]
    %79 = vrot.lane.b32.xlu0 %v78, 24
    %v80 = vpop.permute.xlu0 %79
    %vm81 = vcmask 261312
    %82 = vst.msk [vmem:[#allocation0] sm:$0x1] %vm81, %v80
    %s83 = scalar_lea.vmem %s0, 2
    %v84 = vld [vmem:[%s83] sm:$0x1]
    %85 = vrot.lane.b32.xlu0 %v84, 16
    %v86 = vpop.permute.xlu0 %85
    %vm87 = vcmask 195712
    %88 = vst.msk [vmem:[#allocation0] sm:$0x1] %vm87, %v86
    %s89 = scalar_lea.vmem %s0, 1
    %v90 = vld [vmem:[%s89] sm:$0x1]
    %91 = vrot.lane.b32.xlu0 %v90, 8
    %v92 = vpop.permute.xlu0 %91
    %vm93 = vcmask 130112
    %94 = vst.msk [vmem:[#allocation0] sm:$0x1] %vm93, %v92
    %s96 = sshllo.u32 0, 1
    %v98 = vld [vmem:[#allocation0] sm:%s96]
    %s99 = sshllo.u32 0, 1
    %100 = vst [vmem:[%s1] sm:%s99] %v98

// kernel: perceptual_loss.5
$region0: #{perceptual_loss.5}
  #allocation0 [shape = 'u32[]', space=smem, size = 0x4, offset = 0x4, fixed_abs, tag = 'smem constant byte address 0x4 - core index']
  #allocation1 [shape = 'u32[144,128]{1,0:T(1,128)}', space=vmem, size = 0x12000, scoped, tag = 'internal scratch']
  %s0 = inlined_call_operand.vmem [shape: bf16[64,256], index: 0, kind: input, shape index: {}]
  %s1 = inlined_call_operand.vmem [shape: bf16[256,128], index: 1, kind: input, shape index: {}]
  %s2 = inlined_call_operand.vmem [shape: f32[1,128], index: 2, kind: input, shape index: {}]
  %s3 = inlined_call_operand.vmem [shape: f32[64,128], index: 3, kind: output, shape index: {}]
  %s4 = sld [smem:[#allocation0]]
  $region22: #{perceptual_loss.5} parent=0
    _
  %s6 = ssub.s32 1, %s4
  %s7 = scalar_select 0, %s6, %s4
  // Predicated region
  $region2: #{perceptual_loss.5} parent=0 // pred_check
    _
  $region3: #{perceptual_loss.5} parent=0 // pred_check_branch
    %9 = sbr.rel (0) target = $region5
  $region4: #{perceptual_loss.5} parent=0 // pred_region
    _
  $region5: #{perceptual_loss.5} parent=0 // pred_fallthru
    _
  // Predicated region
  $region6: #{perceptual_loss.5} parent=0 // pred_check
    _
  $region7: #{perceptual_loss.5} parent=0 // pred_check_branch
    %11 = sbr.rel (0) target = $region9
  $region8: #{perceptual_loss.5} parent=0 // pred_region
    _
  $region9: #{perceptual_loss.5} parent=0 // pred_fallthru
    _
  // Predicated region
  $region10: #{perceptual_loss.5} parent=0 // pred_check
    _
  $region11: #{perceptual_loss.5} parent=0 // pred_check_branch
    %13 = sbr.rel (0) target = $region13
  $region12: #{perceptual_loss.5} parent=0 // pred_region
    _
  $region13: #{perceptual_loss.5} parent=0 // pred_fallthru
    _
  %v15 = vld [vmem:[%s0] sm:$0xff]
  %v16 = vld [vmem:[%s0 + $0x8] sm:$0xff]
  %v17 = vld [vmem:[%s0 + $0x10] sm:$0xff]
  %v18 = vld [vmem:[%s0 + $0x18] sm:$0xff]
  %v19 = vld [vmem:[%s0 + $0x20] sm:$0xff]
  %v20 = vld [vmem:[%s0 + $0x28] sm:$0xff]
  %v21 = vld [vmem:[%s0 + $0x30] sm:$0xff]
  %v22 = vld [vmem:[%s0 + $0x38] sm:$0xff]
  %v23 = vld [vmem:[%s1] sm:$0xf]
  %v24 = vld [vmem:[%s1 + $0x4] sm:$0xf]
  %v25 = vld [vmem:[%s1 + $0x8] sm:$0xf]
  %v26 = vld [vmem:[%s1 + $0xc] sm:$0xf]
  %v27 = vld [vmem:[%s1 + $0x10] sm:$0xf]
  %v28 = vld [vmem:[%s1 + $0x14] sm:$0xf]
  %v29 = vld [vmem:[%s1 + $0x18] sm:$0xf]
  %v30 = vld [vmem:[%s1 + $0x1c] sm:$0xf]
  %v31 = vld [vmem:[%s1 + $0x20] sm:$0xf]
  %v32 = vld [vmem:[%s1 + $0x24] sm:$0xf]
  %v33 = vld [vmem:[%s1 + $0x28] sm:$0xf]
  %v34 = vld [vmem:[%s1 + $0x2c] sm:$0xf]
  %v35 = vld [vmem:[%s1 + $0x30] sm:$0xf]
  %v36 = vld [vmem:[%s1 + $0x34] sm:$0xf]
  %v37 = vld [vmem:[%s1 + $0x38] sm:$0xf]
  %v38 = vld [vmem:[%s1 + $0x3c] sm:$0xf]
  %v39 = vld [vmem:[%s1 + $0x40] sm:$0xf]
  %v40 = vld [vmem:[%s1 + $0x44] sm:$0xf]
  %v41 = vld [vmem:[%s1 + $0x48] sm:$0xf]
  %v42 = vld [vmem:[%s1 + $0x4c] sm:$0xf]
  %v43 = vld [vmem:[%s1 + $0x50] sm:$0xf]
  %v44 = vld [vmem:[%s1 + $0x54] sm:$0xf]
  %v45 = vld [vmem:[%s1 + $0x58] sm:$0xf]
  %v46 = vld [vmem:[%s1 + $0x5c] sm:$0xf]
  %v47 = vld [vmem:[%s1 + $0x60] sm:$0xf]
  %v48 = vld [vmem:[%s1 + $0x64] sm:$0xf]
  %v49 = vld [vmem:[%s1 + $0x68] sm:$0xf]
  %v50 = vld [vmem:[%s1 + $0x6c] sm:$0xf]
  %v51 = vld [vmem:[%s1 + $0x70] sm:$0xf]
  %v52 = vld [vmem:[%s1 + $0x74] sm:$0xf]
  %v53 = vld [vmem:[%s1 + $0x78] sm:$0xf]
  %v54 = vld [vmem:[%s1 + $0x7c] sm:$0xf]
  %v55 = vld [vmem:[%s2] sm:$0x1]
  %v57 = vlaneseq
  %v58 = vshrl.u32 %v57, 7
  %v59 = vsub.s32 0, %v58
  %v60 = vrot.slane %v55, %v59
  %v70 = vunpack.c.l.b16 %v15
  %v71 = vunpack.c.h.b16 %v15
  %v72 = vunpack.c.l.b16 %v16
  %v73 = vunpack.c.h.b16 %v16
  %v74 = vunpack.c.l.b16 %v17
  %v75 = vunpack.c.h.b16 %v17
  %v76 = vunpack.c.l.b16 %v18
  %v77 = vunpack.c.h.b16 %v18
  %v78 = vunpack.c.l.b16 %v19
  %v79 = vunpack.c.h.b16 %v19
  %v80 = vunpack.c.l.b16 %v20
  %v81 = vunpack.c.h.b16 %v20
  %v82 = vunpack.c.l.b16 %v21
  %v83 = vunpack.c.h.b16 %v21
  %v84 = vunpack.c.l.b16 %v22
  %v85 = vunpack.c.h.b16 %v22
  %v86 = vpack.c.b16 %v72, %v70
  %v87 = vpack.c.b16 %v73, %v71
  %v88 = vpack.c.b16 %v76, %v74
  %v89 = vpack.c.b16 %v77, %v75
  %v90 = vpack.c.b16 %v80, %v78
  %v91 = vpack.c.b16 %v81, %v79
  %v92 = vpack.c.b16 %v84, %v82
  %v93 = vpack.c.b16 %v85, %v83
  %v134 = vunpack.c.l.b16 %v23
  %v135 = vunpack.c.l.b16 %v24
  %v136 = vunpack.c.l.b16 %v25
  %v137 = vunpack.c.l.b16 %v26
  %v138 = vunpack.c.l.b16 %v27
  %v139 = vunpack.c.l.b16 %v28
  %v140 = vunpack.c.l.b16 %v29
  %v141 = vunpack.c.l.b16 %v30
  %v142 = vunpack.c.l.b16 %v31
  %v143 = vunpack.c.l.b16 %v32
  %v144 = vunpack.c.l.b16 %v33
  %v145 = vunpack.c.l.b16 %v34
  %v146 = vunpack.c.l.b16 %v35
  %v147 = vunpack.c.l.b16 %v36
  %v148 = vunpack.c.l.b16 %v37
  %v149 = vunpack.c.l.b16 %v38
  %v150 = vunpack.c.l.b16 %v39
  %v151 = vunpack.c.l.b16 %v40
  %v152 = vunpack.c.l.b16 %v41
  %v153 = vunpack.c.l.b16 %v42
  %v154 = vunpack.c.l.b16 %v43
  %v155 = vunpack.c.l.b16 %v44
  %v156 = vunpack.c.l.b16 %v45
  %v157 = vunpack.c.l.b16 %v46
  %v158 = vunpack.c.l.b16 %v47
  %v159 = vunpack.c.l.b16 %v48
  %v160 = vunpack.c.l.b16 %v49
  %v161 = vunpack.c.l.b16 %v50
  %v162 = vunpack.c.l.b16 %v51
  %v163 = vunpack.c.l.b16 %v52
  %v164 = vunpack.c.l.b16 %v53
  %v165 = vunpack.c.l.b16 %v54
  %v166 = vpack.c.b16 %v135, %v134
  %v167 = vpack.c.b16 %v137, %v136
  %v168 = vpack.c.b16 %v139, %v138
  %v169 = vpack.c.b16 %v141, %v140
  %v170 = vpack.c.b16 %v143, %v142
  %v171 = vpack.c.b16 %v145, %v144
  %v172 = vpack.c.b16 %v147, %v146
  %v173 = vpack.c.b16 %v149, %v148
  %v174 = vpack.c.b16 %v151, %v150
  %v175 = vpack.c.b16 %v153, %v152
  %v176 = vpack.c.b16 %v155, %v154
  %v177 = vpack.c.b16 %v157, %v156
  %v178 = vpack.c.b16 %v159, %v158
  %v179 = vpack.c.b16 %v161, %v160
  %v180 = vpack.c.b16 %v163, %v162
  %v181 = vpack.c.b16 %v165, %v164
  %198 = vmatprep.subr.bf16.mxu0 0
  %199 = vmatpush1.bf16.msra.mxu0 %v166
  %200 = vmatprep.subr.bf16.mxu0 0
  %201 = vmatpush1.bf16.msra.mxu0 %v167
  %202 = vmatprep.subr.bf16.mxu0 0
  %203 = vmatpush1.bf16.msra.mxu0 %v168
  %204 = vmatprep.subr.bf16.mxu0 0
  %205 = vmatpush1.bf16.msra.mxu0 %v169
  %206 = vmatprep.subr.bf16.mxu0 0
  %207 = vmatpush1.bf16.msra.mxu0 %v170
  %208 = vmatprep.subr.bf16.mxu0 0
  %209 = vmatpush1.bf16.msra.mxu0 %v171
  %210 = vmatprep.subr.bf16.mxu0 0
  %211 = vmatpush1.bf16.msra.mxu0 %v172
  %212 = vmatprep.subr.bf16.mxu0 0
  %213 = vmatpush1.bf16.msra.mxu0 %v173
  %214 = vmatprep.subr.bf16.mxu0 0
  %215 = vmatpush1.bf16.msra.mxu0 %v174
  %216 = vmatprep.subr.bf16.mxu0 0
  %217 = vmatpush1.bf16.msra.mxu0 %v175
  %218 = vmatprep.subr.bf16.mxu0 0
  %219 = vmatpush1.bf16.msra.mxu0 %v176
  %220 = vmatprep.subr.bf16.mxu0 0
  %221 = vmatpush1.bf16.msra.mxu0 %v177
  %222 = vmatprep.subr.bf16.mxu0 0
  %223 = vmatpush1.bf16.msra.mxu0 %v178
  %224 = vmatprep.subr.bf16.mxu0 0
  %225 = vmatpush1.bf16.msra.mxu0 %v179
  %226 = vmatprep.subr.bf16.mxu0 0
  %227 = vmatpush1.bf16.msra.mxu0 %v180
  %228 = vmatprep.subr.bf16.mxu0 0
  %229 = vmatpush1.bf16.msra.mxu0 %v181
  %230 = vmatprep.mubr.bf16.mxu0 %v87
  %231 = vmatmul.mubr.bf16.gmra.mrb[0].mxu0 %v86
  %v232 = vpop.f32.mrb[0].mxu0
  %v233 = vadd.f32 %v60, %v232
  %v234 = vpop.f32.mrb[0].mxu0
  %v235 = vpop.f32.mrb[0].mxu0
  %v236 = vadd.f32 %v60, %v235
  %v237 = vpop.f32.mrb[0].mxu0
  %238 = vmatprep.mubr.bf16.mxu0 %v89
  %239 = vmatmul.mubr.bf16.gmra.mrb[0].mxu0 %v88
  %v240 = vpop.f32.mrb[0].mxu0
  %v241 = vadd.f32 %v60, %v240
  %v242 = vpop.f32.mrb[0].mxu0
  %v243 = vpop.f32.mrb[0].mxu0
  %v244 = vadd.f32 %v60, %v243
  %v245 = vpop.f32.mrb[0].mxu0
  %246 = vmatprep.mubr.bf16.mxu0 %v91
  %247 = vmatmul.mubr.bf16.gmra.mrb[0].mxu0 %v90
  %v248 = vpop.f32.mrb[0].mxu0
  %v249 = vadd.f32 %v60, %v248
  %v250 = vpop.f32.mrb[0].mxu0
  %v251 = vpop.f32.mrb[0].mxu0
  %v252 = vadd.f32 %v60, %v251
  %v253 = vpop.f32.mrb[0].mxu0
  %254 = vmatprep.mubr.bf16.mxu0 %v93
  %255 = vmatmul.mubr.bf16.gmra.mrb[0].mxu0 %v92
  %v256 = vpop.f32.mrb[0].mxu0
  %v257 = vadd.f32 %v60, %v256
  %v258 = vpop.f32.mrb[0].mxu0
  %v259 = vpop.f32.mrb[0].mxu0
  %v260 = vadd.f32 %v60, %v259
  %v261 = vpop.f32.mrb[0].mxu0
  %262 = vdwg.mxu0
  %v263 = vmax.f32 %v233, 0.0
  %v264 = vmax.f32 %v236, 0.0
  %v265 = vmax.f32 %v241, 0.0
  %v266 = vmax.f32 %v244, 0.0
  %v267 = vmax.f32 %v249, 0.0
  %v268 = vmax.f32 %v252, 0.0
  %v269 = vmax.f32 %v257, 0.0
  %v270 = vmax.f32 %v260, 0.0
  %271 = vst [vmem:[%s3] sm:$0xff] %v263
  %272 = vst [vmem:[%s3 + $0x8] sm:$0xff] %v264
  %273 = vst [vmem:[%s3 + $0x10] sm:$0xff] %v265
  %274 = vst [vmem:[%s3 + $0x18] sm:$0xff] %v266
  %275 = vst [vmem:[%s3 + $0x20] sm:$0xff] %v267
  %276 = vst [vmem:[%s3 + $0x28] sm:$0xff] %v268
  %277 = vst [vmem:[%s3 + $0x30] sm:$0xff] %v269
  %278 = vst [vmem:[%s3 + $0x38] sm:$0xff] %v270
  // Predicated region
  $region14: #{perceptual_loss.5} parent=0 // pred_check
    _
  $region15: #{perceptual_loss.5} parent=0 // pred_check_branch
    %280 = sbr.rel (0) target = $region17
  $region16: #{perceptual_loss.5} parent=0 // pred_region
    _
  $region17: #{perceptual_loss.5} parent=0 // pred_fallthru
    _
  // Predicated region
  $region18: #{perceptual_loss.5} parent=0 // pred_check
    _
  $region19: #{perceptual_loss.5} parent=0 // pred_check_branch
    %282 = sbr.rel (0) target = $region21
  $region20: #{perceptual_loss.5} parent=0 // pred_region
    _
  $region21: #{perceptual_loss.5} parent=0 // pred_fallthru
    _

// kernel: perceptual_loss.8
$region0: #{perceptual_loss.8}
  #allocation0 [shape = 'u32[]', space=smem, size = 0x4, offset = 0x4, fixed_abs, tag = 'smem constant byte address 0x4 - core index']
  #allocation1 [shape = 'u32[144,128]{1,0:T(1,128)}', space=vmem, size = 0x12000, scoped, tag = 'internal scratch']
  #allocation2 [shape = 'f32[1,1]{1,0:T(1,128)}', space=smem, size = 0x200, scoped, tag = 'scratch operand']
  %s0 = inlined_call_operand.vmem [shape: f32[64,128], index: 0, kind: input, shape index: {}, may-alias: {0,1}]
  %s1 = inlined_call_operand.vmem [shape: f32[64,128], index: 1, kind: input, shape index: {}, may-alias: {0,1}]
  %s2 = inlined_call_operand.hbm [shape: f32[1,1], index: 2, kind: output, shape index: {}]
  %s3 = sld [smem:[#allocation0]]
  $region26: #{perceptual_loss.8} parent=0
    _
  %s5 = ssub.s32 1, %s3
  %s6 = scalar_select 0, %s5, %s3
  $region1: #{perceptual_loss.8} parent=0
    #allocation3 [shape = 'u8[512]{0}', space=smem, size = 0x200, scoped, tag = 'output window, operand 0, single buffered']
    #allocation4 [shape = 's32[1]{0}', space=sflag, size = 0x4, scoped, tag = 'scoped memory for perceptual_loss.8']
    %7 = vsyncpa [#allocation4], 0
    // Predicated region
    $region2: #{perceptual_loss.8} parent=1 // pred_check
      _
    $region3: #{perceptual_loss.8} parent=1 // pred_check_branch
      %9 = sbr.rel (0) target = $region5
    $region4: #{perceptual_loss.8} parent=1 // pred_region
      _
    $region5: #{perceptual_loss.8} parent=1 // pred_fallthru
      _
    // Predicated region
    $region6: #{perceptual_loss.8} parent=1 // pred_check
      _
    $region7: #{perceptual_loss.8} parent=1 // pred_check_branch
      %11 = sbr.rel (0) target = $region9
    $region8: #{perceptual_loss.8} parent=1 // pred_region
      %s12 = sadd.s32 0, 1
      %s13 = smul.u32 4, %s12
      %p14 = scmp.lt.s32.totalorder %s13, 7
      %s15 = scalar_select %p14, %s13, 7
      %s16 = smul.addr %s15, 8
      %s17 = scalar_lea.vmem %s1, %s16
      %s18 = sadd.s32 0, 1
      %s19 = smul.u32 4, %s18
    $region9: #{perceptual_loss.8} parent=1 // pred_fallthru
      _
    %s20 = sadd.s32 0, 1
    %s21 = smul.u32 4, %s20
    %p22 = scmp.lt.s32.totalorder %s21, 7
    %s23 = scalar_select %p22, %s21, 7
    %s24 = smul.addr %s23, 8
    %s25 = scalar_lea.vmem %s1, %s24
    %s26 = sadd.s32 0, 1
    %s27 = smul.u32 4, %s26
    %p28 = scmp.lt.s32.totalorder %s27, 7
    %s29 = scalar_select %p28, %s27, 7
    %s30 = smul.addr %s29, 8
    %s31 = scalar_lea.vmem %s1, %s30
    %s32 = sadd.s32 0, 1
    %s33 = smul.u32 4, %s32
    %p34 = scmp.eq.s32.totalorder 0, 0
    // Predicated region
    $region10: #{perceptual_loss.8} parent=1 // pred_check
      %p35 = pneg %p34
    $region11: #{perceptual_loss.8} parent=1 // pred_check_branch
      %37 = sbr.rel (%p35) target = $region13
    $region12: #{perceptual_loss.8} parent=1 // pred_region
      %s38 = scalar_lea.smem [#allocation2], 0
      %39 = sst [smem:[%s38]] 0.0
    $region13: #{perceptual_loss.8} parent=1 // pred_fallthru
      _
    %v40 = vld [vmem:[%s0] sm:$0xff]
    %v41 = vld [vmem:[%s0 + $0x8] sm:$0xff]
    %v42 = vld [vmem:[%s0 + $0x10] sm:$0xff]
    %v43 = vld [vmem:[%s0 + $0x18] sm:$0xff]
    %v44 = vld [vmem:[%s31] sm:$0xff]
    %v45 = vld [vmem:[%s31 + $0x8] sm:$0xff]
    %v46 = vld [vmem:[%s31 + $0x10] sm:$0xff]
    %v47 = vld [vmem:[%s31 + $0x18] sm:$0xff]
    %v48 = vsub.f32 %v40, %v44
    %v49 = vsub.f32 %v41, %v45
    %v50 = vsub.f32 %v42, %v46
    %v51 = vsub.f32 %v43, %v47
    %s52 = sld [smem:[#allocation2]]
    %v53 = vmul.f32 %v48, %v48
    %v54 = vmul.f32 %v49, %v49
    %v55 = vmul.f32 %v50, %v50
    %v56 = vmul.f32 %v51, %v51
    %v57 = vadd.f32 %v53, %v54
    %v58 = vadd.f32 %v57, %v55
    %v59 = vadd.f32 %v58, %v56
    %60 = vadd.xlane.f32.xlu0 %v59
    %v61 = vpop.xlane.xlu0 %60
    %v62 = vrot.slane %v61, 4
    %v63 = vadd.f32 %v61, %v62
    %v64 = vrot.slane %v63, 2
    %v65 = vadd.f32 %v63, %v64
    %v66 = vrot.slane %v65, 1
    %v67 = vadd.f32 %v65, %v66
    %s68 = vtos %v67
    %s69 = sadd.f32 %s52, %s68
    %s70 = scalar_lea.smem [#allocation2], 0
    %71 = sst [smem:[%s70]] %s69
    // Predicated region
    $region14: #{perceptual_loss.8} parent=1 // pred_check
      %p72 = pneg %p34
    $region15: #{perceptual_loss.8} parent=1 // pred_check_branch
      %74 = sbr.rel (%p72) target = $region17
    $region16: #{perceptual_loss.8} parent=1 // pred_region
      %s75 = sld [smem:[#allocation2]]
      %s76 = smul.f32 %s75, 0.00024414063
      %s77 = scalar_lea.smem [#allocation3], 0
      %78 = sst [smem:[%s77]] %s76
    $region17: #{perceptual_loss.8} parent=1 // pred_fallthru
      _
    // Predicated region
    $region18: #{perceptual_loss.8} parent=1 // pred_check
      _
    $region19: #{perceptual_loss.8} parent=1 // pred_check_branch
      %80 = sbr.rel (0) target = $region21
    $region20: #{perceptual_loss.8} parent=1 // pred_region
      %s82 = ssub.s32 16, 16
      %83 = vsyncadd [#allocation4], %s82
      %86 = dma.smem_to_hbm [#allocation3], 16, %s2, [#allocation4]
    $region21: #{perceptual_loss.8} parent=1 // pred_fallthru
      _
    // Predicated region
    $region22: #{perceptual_loss.8} parent=1 // pred_check
      _
    $region23: #{perceptual_loss.8} parent=1 // pred_check_branch
      %88 = sbr.rel (0) target = $region25
    $region24: #{perceptual_loss.8} parent=1 // pred_region
      %89 = dma.done [#allocation4], 16
    $region25: #{perceptual_loss.8} parent=1 // pred_fallthru
      _
    %90 = sfence
    %91 = vsyncpa [#allocation4], 1

// kernel: perceptual_loss.6
$region0: #{perceptual_loss.6}
  #allocation0 [shape = 'u32[]', space=smem, size = 0x4, offset = 0x4, fixed_abs, tag = 'smem constant byte address 0x4 - core index']
  #allocation1 [shape = 'u32[144,128]{1,0:T(1,128)}', space=vmem, size = 0x12000, scoped, tag = 'internal scratch']
  %s0 = inlined_call_operand.vmem [shape: bf16[64,512], index: 0, kind: input, shape index: {}]
  %s1 = inlined_call_operand.vmem [shape: bf16[512,128], index: 1, kind: input, shape index: {}]
  %s2 = inlined_call_operand.vmem [shape: f32[1,128], index: 2, kind: input, shape index: {}]
  %s3 = inlined_call_operand.vmem [shape: f32[32,64], index: 3, kind: input, shape index: {}]
  %s4 = inlined_call_operand.vmem [shape: f32[32,64], index: 4, kind: input, shape index: {}]
  %s5 = inlined_call_operand.vmem [shape: f32[128,64], index: 5, kind: input, shape index: {}]
  %s6 = inlined_call_operand.vmem [shape: f32[128,64], index: 6, kind: input, shape index: {}]
  %s7 = inlined_call_operand.vmem [shape: f32[64,128], index: 7, kind: output, shape index: {0}]
  %s8 = inlined_call_operand.vmem [shape: f32[32,64], index: 8, kind: output, shape index: {1}]
  %9 = xla_tuple %s7, %s8
  %s10 = sld [smem:[#allocation0]]
  $region46: #{perceptual_loss.6} parent=0
    _
  %s12 = ssub.s32 1, %s10
  %s13 = scalar_select 0, %s12, %s10
  // Predicated region
  $region2: #{perceptual_loss.6} parent=0 // pred_check
    _
  $region3: #{perceptual_loss.6} parent=0 // pred_check_branch
    %15 = sbr.rel (0) target = $region5
  $region4: #{perceptual_loss.6} parent=0 // pred_region
    _
  $region5: #{perceptual_loss.6} parent=0 // pred_fallthru
    _
  // Predicated region
  $region6: #{perceptual_loss.6} parent=0 // pred_check
    _
  $region7: #{perceptual_loss.6} parent=0 // pred_check_branch
    %17 = sbr.rel (0) target = $region9
  $region8: #{perceptual_loss.6} parent=0 // pred_region
    _
  $region9: #{perceptual_loss.6} parent=0 // pred_fallthru
    _
  // Predicated region
  $region10: #{perceptual_loss.6} parent=0 // pred_check
    _
  $region11: #{perceptual_loss.6} parent=0 // pred_check_branch
    %19 = sbr.rel (0) target = $region13
  $region12: #{perceptual_loss.6} parent=0 // pred_region
    _
  $region13: #{perceptual_loss.6} parent=0 // pred_fallthru
    _
  // Predicated region
  $region14: #{perceptual_loss.6} parent=0 // pred_check
    _
  $region15: #{perceptual_loss.6} parent=0 // pred_check_branch
    %21 = sbr.rel (0) target = $region17
  $region16: #{perceptual_loss.6} parent=0 // pred_region
    _
  $region17: #{perceptual_loss.6} parent=0 // pred_fallthru
    _
  // Predicated region
  $region18: #{perceptual_loss.6} parent=0 // pred_check
    _
  $region19: #{perceptual_loss.6} parent=0 // pred_check_branch
    %23 = sbr.rel (0) target = $region21
  $region20: #{perceptual_loss.6} parent=0 // pred_region
    _
  $region21: #{perceptual_loss.6} parent=0 // pred_fallthru
    _
  // Predicated region
  $region22: #{perceptual_loss.6} parent=0 // pred_check
    _
  $region23: #{perceptual_loss.6} parent=0 // pred_check_branch
    %25 = sbr.rel (0) target = $region25
  $region24: #{perceptual_loss.6} parent=0 // pred_region
    _
  $region25: #{perceptual_loss.6} parent=0 // pred_fallthru
    _
  // Predicated region
  $region26: #{perceptual_loss.6} parent=0 // pred_check
    _
  $region27: #{perceptual_loss.6} parent=0 // pred_check_branch
    %27 = sbr.rel (0) target = $region29
  $region28: #{perceptual_loss.6} parent=0 // pred_region
    _
  $region29: #{perceptual_loss.6} parent=0 // pred_fallthru
    _
  %v29 = vld [vmem:[%s0] sm:$0xff]
  %v30 = vld [vmem:[%s0 + $0x8] sm:$0xff]
  %v31 = vld [vmem:[%s0 + $0x10] sm:$0xff]
  %v32 = vld [vmem:[%s0 + $0x18] sm:$0xff]
  %v33 = vld [vmem:[%s0 + $0x20] sm:$0xff]
  %v34 = vld [vmem:[%s0 + $0x28] sm:$0xff]
  %v35 = vld [vmem:[%s0 + $0x30] sm:$0xff]
  %v36 = vld [vmem:[%s0 + $0x38] sm:$0xff]
  %v37 = vld [vmem:[%s0 + $0x40] sm:$0xff]
  %v38 = vld [vmem:[%s0 + $0x48] sm:$0xff]
  %v39 = vld [vmem:[%s0 + $0x50] sm:$0xff]
  %v40 = vld [vmem:[%s0 + $0x58] sm:$0xff]
  %v41 = vld [vmem:[%s0 + $0x60] sm:$0xff]
  %v42 = vld [vmem:[%s0 + $0x68] sm:$0xff]
  %v43 = vld [vmem:[%s0 + $0x70] sm:$0xff]
  %v44 = vld [vmem:[%s0 + $0x78] sm:$0xff]
  %v45 = vld [vmem:[%s1] sm:$0xf]
  %v46 = vld [vmem:[%s1 + $0x4] sm:$0xf]
  %v47 = vld [vmem:[%s1 + $0x8] sm:$0xf]
  %v48 = vld [vmem:[%s1 + $0xc] sm:$0xf]
  %v49 = vld [vmem:[%s1 + $0x10] sm:$0xf]
  %v50 = vld [vmem:[%s1 + $0x14] sm:$0xf]
  %v51 = vld [vmem:[%s1 + $0x18] sm:$0xf]
  %v52 = vld [vmem:[%s1 + $0x1c] sm:$0xf]
  %v53 = vld [vmem:[%s1 + $0x20] sm:$0xf]
  %v54 = vld [vmem:[%s1 + $0x24] sm:$0xf]
  %v55 = vld [vmem:[%s1 + $0x28] sm:$0xf]
  %v56 = vld [vmem:[%s1 + $0x2c] sm:$0xf]
  %v57 = vld [vmem:[%s1 + $0x30] sm:$0xf]
  %v58 = vld [vmem:[%s1 + $0x34] sm:$0xf]
  %v59 = vld [vmem:[%s1 + $0x38] sm:$0xf]
  %v60 = vld [vmem:[%s1 + $0x3c] sm:$0xf]
  %v61 = vld [vmem:[%s1 + $0x40] sm:$0xf]
  %v62 = vld [vmem:[%s1 + $0x44] sm:$0xf]
  %v63 = vld [vmem:[%s1 + $0x48] sm:$0xf]
  %v64 = vld [vmem:[%s1 + $0x4c] sm:$0xf]
  %v65 = vld [vmem:[%s1 + $0x50] sm:$0xf]
  %v66 = vld [vmem:[%s1 + $0x54] sm:$0xf]
  %v67 = vld [vmem:[%s1 + $0x58] sm:$0xf]
  %v68 = vld [vmem:[%s1 + $0x5c] sm:$0xf]
  %v69 = vld [vmem:[%s1 + $0x60] sm:$0xf]
  %v70 = vld [vmem:[%s1 + $0x64] sm:$0xf]
  %v71 = vld [vmem:[%s1 + $0x68] sm:$0xf]
  %v72 = vld [vmem:[%s1 + $0x6c] sm:$0xf]
  %v73 = vld [vmem:[%s1 + $0x70] sm:$0xf]
  %v74 = vld [vmem:[%s1 + $0x74] sm:$0xf]
  %v75 = vld [vmem:[%s1 + $0x78] sm:$0xf]
  %v76 = vld [vmem:[%s1 + $0x7c] sm:$0xf]
  %v77 = vld [vmem:[%s1 + $0x80] sm:$0xf]
  %v78 = vld [vmem:[%s1 + $0x84] sm:$0xf]
  %v79 = vld [vmem:[%s1 + $0x88] sm:$0xf]
  %v80 = vld [vmem:[%s1 + $0x8c] sm:$0xf]
  %v81 = vld [vmem:[%s1 + $0x90] sm:$0xf]
  %v82 = vld [vmem:[%s1 + $0x94] sm:$0xf]
  %v83 = vld [vmem:[%s1 + $0x98] sm:$0xf]
  %v84 = vld [vmem:[%s1 + $0x9c] sm:$0xf]
  %v85 = vld [vmem:[%s1 + $0xa0] sm:$0xf]
  %v86 = vld [vmem:[%s1 + $0xa4] sm:$0xf]
  %v87 = vld [vmem:[%s1 + $0xa8] sm:$0xf]
  %v88 = vld [vmem:[%s1 + $0xac] sm:$0xf]
  %v89 = vld [vmem:[%s1 + $0xb0] sm:$0xf]
  %v90 = vld [vmem:[%s1 + $0xb4] sm:$0xf]
  %v91 = vld [vmem:[%s1 + $0xb8] sm:$0xf]
  %v92 = vld [vmem:[%s1 + $0xbc] sm:$0xf]
  %v93 = vld [vmem:[%s1 + $0xc0] sm:$0xf]
  %v94 = vld [vmem:[%s1 + $0xc4] sm:$0xf]
  %v95 = vld [vmem:[%s1 + $0xc8] sm:$0xf]
  %v96 = vld [vmem:[%s1 + $0xcc] sm:$0xf]
  %v97 = vld [vmem:[%s1 + $0xd0] sm:$0xf]
  %v98 = vld [vmem:[%s1 + $0xd4] sm:$0xf]
  %v99 = vld [vmem:[%s1 + $0xd8] sm:$0xf]
  %v100 = vld [vmem:[%s1 + $0xdc] sm:$0xf]
  %v101 = vld [vmem:[%s1 + $0xe0] sm:$0xf]
  %v102 = vld [vmem:[%s1 + $0xe4] sm:$0xf]
  %v103 = vld [vmem:[%s1 + $0xe8] sm:$0xf]
  %v104 = vld [vmem:[%s1 + $0xec] sm:$0xf]
  %v105 = vld [vmem:[%s1 + $0xf0] sm:$0xf]
  %v106 = vld [vmem:[%s1 + $0xf4] sm:$0xf]
  %v107 = vld [vmem:[%s1 + $0xf8] sm:$0xf]
  %v108 = vld [vmem:[%s1 + $0xfc] sm:$0xf]
  %v109 = vld [vmem:[%s2] sm:$0x1]
  %v111 = vlaneseq
  %v112 = vshrl.u32 %v111, 7
  %v113 = vsub.s32 0, %v112
  %v114 = vrot.slane %v109, %v113
  %v132 = vunpack.c.l.b16 %v29
  %v133 = vunpack.c.h.b16 %v29
  %v134 = vunpack.c.l.b16 %v30
  %v135 = vunpack.c.h.b16 %v30
  %v136 = vunpack.c.l.b16 %v31
  %v137 = vunpack.c.h.b16 %v31
  %v138 = vunpack.c.l.b16 %v32
  %v139 = vunpack.c.h.b16 %v32
  %v140 = vunpack.c.l.b16 %v33
  %v141 = vunpack.c.h.b16 %v33
  %v142 = vunpack.c.l.b16 %v34
  %v143 = vunpack.c.h.b16 %v34
  %v144 = vunpack.c.l.b16 %v35
  %v145 = vunpack.c.h.b16 %v35
  %v146 = vunpack.c.l.b16 %v36
  %v147 = vunpack.c.h.b16 %v36
  %v148 = vunpack.c.l.b16 %v37
  %v149 = vunpack.c.h.b16 %v37
  %v150 = vunpack.c.l.b16 %v38
  %v151 = vunpack.c.h.b16 %v38
  %v152 = vunpack.c.l.b16 %v39
  %v153 = vunpack.c.h.b16 %v39
  %v154 = vunpack.c.l.b16 %v40
  %v155 = vunpack.c.h.b16 %v40
  %v156 = vunpack.c.l.b16 %v41
  %v157 = vunpack.c.h.b16 %v41
  %v158 = vunpack.c.l.b16 %v42
  %v159 = vunpack.c.h.b16 %v42
  %v160 = vunpack.c.l.b16 %v43
  %v161 = vunpack.c.h.b16 %v43
  %v162 = vunpack.c.l.b16 %v44
  %v163 = vunpack.c.h.b16 %v44
  %v164 = vpack.c.b16 %v136, %v132
  %v165 = vpack.c.b16 %v137, %v133
  %v166 = vpack.c.b16 %v138, %v134
  %v167 = vpack.c.b16 %v139, %v135
  %v168 = vpack.c.b16 %v144, %v140
  %v169 = vpack.c.b16 %v145, %v141
  %v170 = vpack.c.b16 %v146, %v142
  %v171 = vpack.c.b16 %v147, %v143
  %v172 = vpack.c.b16 %v152, %v148
  %v173 = vpack.c.b16 %v153, %v149
  %v174 = vpack.c.b16 %v154, %v150
  %v175 = vpack.c.b16 %v155, %v151
  %v176 = vpack.c.b16 %v160, %v156
  %v177 = vpack.c.b16 %v161, %v157
  %v178 = vpack.c.b16 %v162, %v158
  %v179 = vpack.c.b16 %v163, %v159
  %v260 = vunpack.c.l.b16 %v45
  %v261 = vunpack.c.l.b16 %v46
  %v262 = vunpack.c.l.b16 %v47
  %v263 = vunpack.c.l.b16 %v48
  %v264 = vunpack.c.l.b16 %v49
  %v265 = vunpack.c.l.b16 %v50
  %v266 = vunpack.c.l.b16 %v51
  %v267 = vunpack.c.l.b16 %v52
  %v268 = vunpack.c.l.b16 %v53
  %v269 = vunpack.c.l.b16 %v54
  %v270 = vunpack.c.l.b16 %v55
  %v271 = vunpack.c.l.b16 %v56
  %v272 = vunpack.c.l.b16 %v57
  %v273 = vunpack.c.l.b16 %v58
  %v274 = vunpack.c.l.b16 %v59
  %v275 = vunpack.c.l.b16 %v60
  %v276 = vunpack.c.l.b16 %v61
  %v277 = vunpack.c.l.b16 %v62
  %v278 = vunpack.c.l.b16 %v63
  %v279 = vunpack.c.l.b16 %v64
  %v280 = vunpack.c.l.b16 %v65
  %v281 = vunpack.c.l.b16 %v66
  %v282 = vunpack.c.l.b16 %v67
  %v283 = vunpack.c.l.b16 %v68
  %v284 = vunpack.c.l.b16 %v69
  %v285 = vunpack.c.l.b16 %v70
  %v286 = vunpack.c.l.b16 %v71
  %v287 = vunpack.c.l.b16 %v72
  %v288 = vunpack.c.l.b16 %v73
  %v289 = vunpack.c.l.b16 %v74
  %v290 = vunpack.c.l.b16 %v75
  %v291 = vunpack.c.l.b16 %v76
  %v292 = vunpack.c.l.b16 %v77
  %v293 = vunpack.c.l.b16 %v78
  %v294 = vunpack.c.l.b16 %v79
  %v295 = vunpack.c.l.b16 %v80
  %v296 = vunpack.c.l.b16 %v81
  %v297 = vunpack.c.l.b16 %v82
  %v298 = vunpack.c.l.b16 %v83
  %v299 = vunpack.c.l.b16 %v84
  %v300 = vunpack.c.l.b16 %v85
  %v301 = vunpack.c.l.b16 %v86
  %v302 = vunpack.c.l.b16 %v87
  %v303 = vunpack.c.l.b16 %v88
  %v304 = vunpack.c.l.b16 %v89
  %v305 = vunpack.c.l.b16 %v90
  %v306 = vunpack.c.l.b16 %v91
  %v307 = vunpack.c.l.b16 %v92
  %v308 = vunpack.c.l.b16 %v93
  %v309 = vunpack.c.l.b16 %v94
  %v310 = vunpack.c.l.b16 %v95
  %v311 = vunpack.c.l.b16 %v96
  %v312 = vunpack.c.l.b16 %v97
  %v313 = vunpack.c.l.b16 %v98
  %v314 = vunpack.c.l.b16 %v99
  %v315 = vunpack.c.l.b16 %v100
  %v316 = vunpack.c.l.b16 %v101
  %v317 = vunpack.c.l.b16 %v102
  %v318 = vunpack.c.l.b16 %v103
  %v319 = vunpack.c.l.b16 %v104
  %v320 = vunpack.c.l.b16 %v105
  %v321 = vunpack.c.l.b16 %v106
  %v322 = vunpack.c.l.b16 %v107
  %v323 = vunpack.c.l.b16 %v108
  %v324 = vpack.c.b16 %v261, %v260
  %v325 = vpack.c.b16 %v263, %v262
  %v326 = vpack.c.b16 %v265, %v264
  %v327 = vpack.c.b16 %v267, %v266
  %v328 = vpack.c.b16 %v269, %v268
  %v329 = vpack.c.b16 %v271, %v270
  %v330 = vpack.c.b16 %v273, %v272
  %v331 = vpack.c.b16 %v275, %v274
  %v332 = vpack.c.b16 %v277, %v276
  %v333 = vpack.c.b16 %v279, %v278
  %v334 = vpack.c.b16 %v281, %v280
  %v335 = vpack.c.b16 %v283, %v282
  %v336 = vpack.c.b16 %v285, %v284
  %v337 = vpack.c.b16 %v287, %v286
  %v338 = vpack.c.b16 %v289, %v288
  %v339 = vpack.c.b16 %v291, %v290
  %v340 = vpack.c.b16 %v293, %v292
  %v341 = vpack.c.b16 %v295, %v294
  %v342 = vpack.c.b16 %v297, %v296
  %v343 = vpack.c.b16 %v299, %v298
  %v344 = vpack.c.b16 %v301, %v300
  %v345 = vpack.c.b16 %v303, %v302
  %v346 = vpack.c.b16 %v305, %v304
  %v347 = vpack.c.b16 %v307, %v306
  %v348 = vpack.c.b16 %v309, %v308
  %v349 = vpack.c.b16 %v311, %v310
  %v350 = vpack.c.b16 %v313, %v312
  %v351 = vpack.c.b16 %v315, %v314
  %v352 = vpack.c.b16 %v317, %v316
  %v353 = vpack.c.b16 %v319, %v318
  %v354 = vpack.c.b16 %v321, %v320
  %v355 = vpack.c.b16 %v323, %v322
  %388 = vmatprep.subr.bf16.mxu0 0
  %389 = vmatpush1.bf16.msra.mxu0 %v324
  %390 = vmatprep.subr.bf16.mxu0 0
  %391 = vmatpush1.bf16.msra.mxu0 %v325
  %392 = vmatprep.subr.bf16.mxu0 0
  %393 = vmatpush1.bf16.msra.mxu0 %v326
  %394 = vmatprep.subr.bf16.mxu0 0
  %395 = vmatpush1.bf16.msra.mxu0 %v327
  %396 = vmatprep.subr.bf16.mxu0 0
  %397 = vmatpush1.bf16.msra.mxu0 %v328
  %398 = vmatprep.subr.bf16.mxu0 0
  %399 = vmatpush1.bf16.msra.mxu0 %v329
  %400 = vmatprep.subr.bf16.mxu0 0
  %401 = vmatpush1.bf16.msra.mxu0 %v330
  %402 = vmatprep.subr.bf16.mxu0 0
  %403 = vmatpush1.bf16.msra.mxu0 %v331
  %404 = vmatprep.subr.bf16.mxu0 0
  %405 = vmatpush1.bf16.msra.mxu0 %v332
  %406 = vmatprep.subr.bf16.mxu0 0
  %407 = vmatpush1.bf16.msra.mxu0 %v333
  %408 = vmatprep.subr.bf16.mxu0 0
  %409 = vmatpush1.bf16.msra.mxu0 %v334
  %410 = vmatprep.subr.bf16.mxu0 0
  %411 = vmatpush1.bf16.msra.mxu0 %v335
  %412 = vmatprep.subr.bf16.mxu0 0
  %413 = vmatpush1.bf16.msra.mxu0 %v336
  %414 = vmatprep.subr.bf16.mxu0 0
  %415 = vmatpush1.bf16.msra.mxu0 %v337
  %416 = vmatprep.subr.bf16.mxu0 0
  %417 = vmatpush1.bf16.msra.mxu0 %v338
  %418 = vmatprep.subr.bf16.mxu0 0
  %419 = vmatpush1.bf16.msra.mxu0 %v339
  %420 = vmatprep.mubr.bf16.mxu0 %v165
  %421 = vmatmul.mubr.bf16.gmra.mrb[0].mxu0 %v164
  %v422 = vpop.f32.mrb[0].mxu0
  %v423 = vadd.f32 %v114, %v422
  %v424 = vpop.f32.mrb[0].mxu0
  %v425 = vpop.f32.mrb[0].mxu0
  %v426 = vadd.f32 %v114, %v425
  %v427 = vpop.f32.mrb[0].mxu0
  %428 = vmatprep.mubr.bf16.mxu0 %v169
  %429 = vmatmul.mubr.bf16.gmra.mrb[0].mxu0 %v168
  %v430 = vpop.f32.mrb[0].mxu0
  %v431 = vadd.f32 %v114, %v430
  %v432 = vpop.f32.mrb[0].mxu0
  %v433 = vpop.f32.mrb[0].mxu0
  %v434 = vadd.f32 %v114, %v433
  %v435 = vpop.f32.mrb[0].mxu0
  %436 = vmatprep.mubr.bf16.mxu0 %v173
  %437 = vmatmul.mubr.bf16.gmra.mrb[0].mxu0 %v172
  %v438 = vpop.f32.mrb[0].mxu0
  %v439 = vadd.f32 %v114, %v438
  %v440 = vpop.f32.mrb[0].mxu0
  %v441 = vpop.f32.mrb[0].mxu0
  %v442 = vadd.f32 %v114, %v441
  %v443 = vpop.f32.mrb[0].mxu0
  %444 = vmatprep.mubr.bf16.mxu0 %v177
  %445 = vmatmul.mubr.bf16.gmra.mrb[0].mxu0 %v176
  %v446 = vpop.f32.mrb[0].mxu0
  %v447 = vadd.f32 %v114, %v446
  %v448 = vpop.f32.mrb[0].mxu0
  %v449 = vpop.f32.mrb[0].mxu0
  %v450 = vadd.f32 %v114, %v449
  %v451 = vpop.f32.mrb[0].mxu0
  %452 = vdwg.mxu0
  %453 = vmatprep.subr.bf16.mxu0 0
  %454 = vmatpush1.bf16.msra.mxu0 %v340
  %455 = vmatprep.subr.bf16.mxu0 0
  %456 = vmatpush1.bf16.msra.mxu0 %v341
  %457 = vmatprep.subr.bf16.mxu0 0
  %458 = vmatpush1.bf16.msra.mxu0 %v342
  %459 = vmatprep.subr.bf16.mxu0 0
  %460 = vmatpush1.bf16.msra.mxu0 %v343
  %461 = vmatprep.subr.bf16.mxu0 0
  %462 = vmatpush1.bf16.msra.mxu0 %v344
  %463 = vmatprep.subr.bf16.mxu0 0
  %464 = vmatpush1.bf16.msra.mxu0 %v345
  %465 = vmatprep.subr.bf16.mxu0 0
  %466 = vmatpush1.bf16.msra.mxu0 %v346
  %467 = vmatprep.subr.bf16.mxu0 0
  %468 = vmatpush1.bf16.msra.mxu0 %v347
  %469 = vmatprep.subr.bf16.mxu0 0
  %470 = vmatpush1.bf16.msra.mxu0 %v348
  %471 = vmatprep.subr.bf16.mxu0 0
  %472 = vmatpush1.bf16.msra.mxu0 %v349
  %473 = vmatprep.subr.bf16.mxu0 0
  %474 = vmatpush1.bf16.msra.mxu0 %v350
  %475 = vmatprep.subr.bf16.mxu0 0
  %476 = vmatpush1.bf16.msra.mxu0 %v351
  %477 = vmatprep.subr.bf16.mxu0 0
  %478 = vmatpush1.bf16.msra.mxu0 %v352
  %479 = vmatprep.subr.bf16.mxu0 0
  %480 = vmatpush1.bf16.msra.mxu0 %v353
  %481 = vmatprep.subr.bf16.mxu0 0
  %482 = vmatpush1.bf16.msra.mxu0 %v354
  %483 = vmatprep.subr.bf16.mxu0 0
  %484 = vmatpush1.bf16.msra.mxu0 %v355
  %485 = vmatprep.mubr.bf16.mxu0 %v167
  %486 = vmatmul.mubr.bf16.gmra.mrb[0].mxu0 %v166
  %v487 = vpop.f32.mrb[0].mxu0
  %v488 = vadd.f32 %v423, %v487
  %v489 = vpop.f32.mrb[0].mxu0
  %v490 = vpop.f32.mrb[0].mxu0
  %v491 = vadd.f32 %v426, %v490
  %v492 = vpop.f32.mrb[0].mxu0
  %493 = vmatprep.mubr.bf16.mxu0 %v171
  %494 = vmatmul.mubr.bf16.gmra.mrb[0].mxu0 %v170
  %v495 = vpop.f32.mrb[0].mxu0
  %v496 = vadd.f32 %v431, %v495
  %v497 = vpop.f32.mrb[0].mxu0
  %v498 = vpop.f32.mrb[0].mxu0
  %v499 = vadd.f32 %v434, %v498
  %v500 = vpop.f32.mrb[0].mxu0
  %501 = vmatprep.mubr.bf16.mxu0 %v175
  %502 = vmatmul.mubr.bf16.gmra.mrb[0].mxu0 %v174
  %v503 = vpop.f32.mrb[0].mxu0
  %v504 = vadd.f32 %v439, %v503
  %v505 = vpop.f32.mrb[0].mxu0
  %v506 = vpop.f32.mrb[0].mxu0
  %v507 = vadd.f32 %v442, %v506
  %v508 = vpop.f32.mrb[0].mxu0
  %509 = vmatprep.mubr.bf16.mxu0 %v179
  %510 = vmatmul.mubr.bf16.gmra.mrb[0].mxu0 %v178
  %v511 = vpop.f32.mrb[0].mxu0
  %v512 = vadd.f32 %v447, %v511
  %v513 = vpop.f32.mrb[0].mxu0
  %v514 = vpop.f32.mrb[0].mxu0
  %v515 = vadd.f32 %v450, %v514
  %v516 = vpop.f32.mrb[0].mxu0
  %517 = vdwg.mxu0
  %v518 = vmax.f32 %v488, 0.0
  %v519 = vmax.f32 %v491, 0.0
  %v520 = vmax.f32 %v496, 0.0
  %v521 = vmax.f32 %v499, 0.0
  %v522 = vmax.f32 %v504, 0.0
  %v523 = vmax.f32 %v507, 0.0
  %v524 = vmax.f32 %v512, 0.0
  %v525 = vmax.f32 %v515, 0.0
  %526 = vst [vmem:[%s7] sm:$0xff] %v518
  %527 = vst [vmem:[%s7 + $0x8] sm:$0xff] %v519
  %528 = vst [vmem:[%s7 + $0x10] sm:$0xff] %v520
  %529 = vst [vmem:[%s7 + $0x18] sm:$0xff] %v521
  %530 = vst [vmem:[%s7 + $0x20] sm:$0xff] %v522
  %531 = vst [vmem:[%s7 + $0x28] sm:$0xff] %v523
  %532 = vst [vmem:[%s7 + $0x30] sm:$0xff] %v524
  %533 = vst [vmem:[%s7 + $0x38] sm:$0xff] %v525
  %v534 = vld [vmem:[%s3] sm:$0xff]
  %v535 = vld [vmem:[%s3 + $0x8] sm:$0xff]
  %v536 = vld [vmem:[%s3 + $0x10] sm:$0xff]
  %v537 = vld [vmem:[%s3 + $0x18] sm:$0xff]
  %vm538 = vcmask 523264
  %v540 = vsel %vm538, %v534, 0
  %v543 = vsel %vm538, %v535, 0
  %v546 = vsel %vm538, %v536, 0
  %v549 = vsel %vm538, %v537, 0
  %551 = vmatprep.subr.mxu0 0.0
  %552 = vmatpush1.msra.mxu0 %v518
  %553 = vmatprep.subr.mxu0 0.0
  %554 = vmatpush1.msra.mxu0 %v519
  %555 = vmatprep.subr.mxu0 0.0
  %556 = vmatpush1.msra.mxu0 %v520
  %557 = vmatprep.subr.mxu0 0.0
  %558 = vmatpush1.msra.mxu0 %v521
  %559 = vmatprep.subr.mxu0 0.0
  %560 = vmatpush1.msra.mxu0 %v522
  %561 = vmatprep.subr.mxu0 0.0
  %562 = vmatpush1.msra.mxu0 %v523
  %563 = vmatprep.subr.mxu0 0.0
  %564 = vmatpush1.msra.mxu0 %v524
  %565 = vmatprep.subr.mxu0 0.0
  %566 = vmatpush1.msra.mxu0 %v525
  %567 = vmatprep.subr.mxu0 0.0
  %568 = vmatpush1.msra.mxu0 0.0
  %569 = vmatprep.subr.mxu0 0.0
  %570 = vmatpush1.msra.mxu0 0.0
  %571 = vmatprep.subr.mxu0 0.0
  %572 = vmatpush1.msra.mxu0 0.0
  %573 = vmatprep.subr.mxu0 0.0
  %574 = vmatpush1.msra.mxu0 0.0
  %575 = vmatprep.subr.mxu0 0.0
  %576 = vmatpush1.msra.mxu0 0.0
  %577 = vmatprep.subr.mxu0 0.0
  %578 = vmatpush1.msra.mxu0 0.0
  %579 = vmatprep.subr.mxu0 0.0
  %580 = vmatpush1.msra.mxu0 0.0
  %581 = vmatprep.subr.mxu0 0.0
  %582 = vmatpush1.msra.mxu0 0.0
  %583 = vmatprep.subr.mxu0 0.0
  %584 = vmatpush1.msra.mxu0 0.0
  %585 = vmatprep.subr.mxu0 0.0
  %586 = vmatpush1.msra.mxu0 0.0
  %587 = vmatprep.subr.mxu0 0.0
  %588 = vmatpush1.msra.mxu0 0.0
  %589 = vmatprep.subr.mxu0 0.0
  %590 = vmatpush1.msra.mxu0 0.0
  %591 = vmatprep.subr.mxu0 0.0
  %592 = vmatpush1.msra.mxu0 0.0
  %593 = vmatprep.subr.mxu0 0.0
  %594 = vmatpush1.msra.mxu0 0.0
  %595 = vmatprep.subr.mxu0 0.0
  %596 = vmatpush1.msra.mxu0 0.0
  %597 = vmatprep.subr.mxu0 0.0
  %598 = vmatpush1.msra.mxu0 0.0
  %599 = vmatprep.subr.mxu0 0.0
  %600 = vmatpush1.msra.mxu0 0.0
  %601 = vmatprep.subr.mxu0 0.0
  %602 = vmatpush1.msra.mxu0 0.0
  %603 = vmatprep.subr.mxu0 0.0
  %604 = vmatpush1.msra.mxu0 0.0
  %605 = vmatprep.subr.mxu0 0.0
  %606 = vmatpush1.msra.mxu0 0.0
  %607 = vmatprep.subr.mxu0 0.0
  %608 = vmatpush1.msra.mxu0 0.0
  %609 = vmatprep.subr.mxu0 0.0
  %610 = vmatpush1.msra.mxu0 0.0
  %611 = vmatprep.subr.mxu0 0.0
  %612 = vmatpush1.msra.mxu0 0.0
  %613 = vmatprep.subr.mxu0 0.0
  %614 = vmatpush1.msra.mxu0 0.0
  %615 = vmatprep.mubr.f32.mxu0 0.0
  %616 = vmatmul.mubr.f32.gmra.mrb[0].mxu0 %v540
  %v617 = vpop.f32.mrb[0].mxu0
  %v618 = vadd.f32 0.0, %v617
  %v619 = vpop.f32.mrb[0].mxu0
  %620 = vmatprep.mubr.f32.mxu0 0.0
  %621 = vmatmul.mubr.f32.gmra.mrb[0].mxu0 %v543
  %v622 = vpop.f32.mrb[0].mxu0
  %v623 = vadd.f32 0.0, %v622
  %v624 = vpop.f32.mrb[0].mxu0
  %625 = vmatprep.mubr.f32.mxu0 0.0
  %626 = vmatmul.mubr.f32.gmra.mrb[0].mxu0 %v546
  %v627 = vpop.f32.mrb[0].mxu0
  %v628 = vadd.f32 0.0, %v627
  %v629 = vpop.f32.mrb[0].mxu0
  %630 = vmatprep.mubr.f32.mxu0 0.0
  %631 = vmatmul.mubr.f32.gmra.mrb[0].mxu0 %v549
  %v632 = vpop.f32.mrb[0].mxu0
  %v633 = vadd.f32 0.0, %v632
  %v634 = vpop.f32.mrb[0].mxu0
  %635 = vdwg.mxu0
  %v636 = vld [vmem:[%s4] sm:$0xff]
  %v637 = vld [vmem:[%s4 + $0x8] sm:$0xff]
  %v638 = vld [vmem:[%s4 + $0x10] sm:$0xff]
  %v639 = vld [vmem:[%s4 + $0x18] sm:$0xff]
  %v641 = vsel %vm538, %v636, 0
  %v644 = vsel %vm538, %v637, 0
  %v647 = vsel %vm538, %v638, 0
  %v650 = vsel %vm538, %v639, 0
  %652 = vmatprep.subr.mxu0 0.0
  %653 = vmatpush1.msra.mxu0 %v518
  %654 = vmatprep.subr.mxu0 0.0
  %655 = vmatpush1.msra.mxu0 %v519
  %656 = vmatprep.subr.mxu0 0.0
  %657 = vmatpush1.msra.mxu0 %v520
  %658 = vmatprep.subr.mxu0 0.0
  %659 = vmatpush1.msra.mxu0 %v521
  %660 = vmatprep.subr.mxu0 0.0
  %661 = vmatpush1.msra.mxu0 %v522
  %662 = vmatprep.subr.mxu0 0.0
  %663 = vmatpush1.msra.mxu0 %v523
  %664 = vmatprep.subr.mxu0 0.0
  %665 = vmatpush1.msra.mxu0 %v524
  %666 = vmatprep.subr.mxu0 0.0
  %667 = vmatpush1.msra.mxu0 %v525
  %668 = vmatprep.subr.mxu0 0.0
  %669 = vmatpush1.msra.mxu0 0.0
  %670 = vmatprep.subr.mxu0 0.0
  %671 = vmatpush1.msra.mxu0 0.0
  %672 = vmatprep.subr.mxu0 0.0
  %673 = vmatpush1.msra.mxu0 0.0
  %674 = vmatprep.subr.mxu0 0.0
  %675 = vmatpush1.msra.mxu0 0.0
  %676 = vmatprep.subr.mxu0 0.0
  %677 = vmatpush1.msra.mxu0 0.0
  %678 = vmatprep.subr.mxu0 0.0
  %679 = vmatpush1.msra.mxu0 0.0
  %680 = vmatprep.subr.mxu0 0.0
  %681 = vmatpush1.msra.mxu0 0.0
  %682 = vmatprep.subr.mxu0 0.0
  %683 = vmatpush1.msra.mxu0 0.0
  %684 = vmatprep.subr.mxu0 0.0
  %685 = vmatpush1.msra.mxu0 0.0
  %686 = vmatprep.subr.mxu0 0.0
  %687 = vmatpush1.msra.mxu0 0.0
  %688 = vmatprep.subr.mxu0 0.0
  %689 = vmatpush1.msra.mxu0 0.0
  %690 = vmatprep.subr.mxu0 0.0
  %691 = vmatpush1.msra.mxu0 0.0
  %692 = vmatprep.subr.mxu0 0.0
  %693 = vmatpush1.msra.mxu0 0.0
  %694 = vmatprep.subr.mxu0 0.0
  %695 = vmatpush1.msra.mxu0 0.0
  %696 = vmatprep.subr.mxu0 0.0
  %697 = vmatpush1.msra.mxu0 0.0
  %698 = vmatprep.subr.mxu0 0.0
  %699 = vmatpush1.msra.mxu0 0.0
  %700 = vmatprep.subr.mxu0 0.0
  %701 = vmatpush1.msra.mxu0 0.0
  %702 = vmatprep.subr.mxu0 0.0
  %703 = vmatpush1.msra.mxu0 0.0
  %704 = vmatprep.subr.mxu0 0.0
  %705 = vmatpush1.msra.mxu0 0.0
  %706 = vmatprep.subr.mxu0 0.0
  %707 = vmatpush1.msra.mxu0 0.0
  %708 = vmatprep.subr.mxu0 0.0
  %709 = vmatpush1.msra.mxu0 0.0
  %710 = vmatprep.subr.mxu0 0.0
  %711 = vmatpush1.msra.mxu0 0.0
  %712 = vmatprep.subr.mxu0 0.0
  %713 = vmatpush1.msra.mxu0 0.0
  %714 = vmatprep.subr.mxu0 0.0
  %715 = vmatpush1.msra.mxu0 0.0
  %716 = vmatprep.mubr.f32.mxu0 0.0
  %717 = vmatmul.mubr.f32.gmra.mrb[0].mxu0 %v641
  %v718 = vpop.f32.mrb[0].mxu0
  %v719 = vadd.f32 0.0, %v718
  %v720 = vpop.f32.mrb[0].mxu0
  %721 = vmatprep.mubr.f32.mxu0 0.0
  %722 = vmatmul.mubr.f32.gmra.mrb[0].mxu0 %v644
  %v723 = vpop.f32.mrb[0].mxu0
  %v724 = vadd.f32 0.0, %v723
  %v725 = vpop.f32.mrb[0].mxu0
  %726 = vmatprep.mubr.f32.mxu0 0.0
  %727 = vmatmul.mubr.f32.gmra.mrb[0].mxu0 %v647
  %v728 = vpop.f32.mrb[0].mxu0
  %v729 = vadd.f32 0.0, %v728
  %v730 = vpop.f32.mrb[0].mxu0
  %731 = vmatprep.mubr.f32.mxu0 0.0
  %732 = vmatmul.mubr.f32.gmra.mrb[0].mxu0 %v650
  %v733 = vpop.f32.mrb[0].mxu0
  %v734 = vadd.f32 0.0, %v733
  %v735 = vpop.f32.mrb[0].mxu0
  %736 = vdwg.mxu0
  %v737 = vmax.f32 %v618, %v719
  %v738 = vmax.f32 %v623, %v724
  %v739 = vmax.f32 %v628, %v729
  %v740 = vmax.f32 %v633, %v734
  %v741 = vld [vmem:[%s5] sm:$0xff]
  %v742 = vld [vmem:[%s5 + $0x8] sm:$0xff]
  %v743 = vld [vmem:[%s5 + $0x10] sm:$0xff]
  %v744 = vld [vmem:[%s5 + $0x18] sm:$0xff]
  %v745 = vld [vmem:[%s5 + $0x20] sm:$0xff]
  %v746 = vld [vmem:[%s5 + $0x28] sm:$0xff]
  %v747 = vld [vmem:[%s5 + $0x30] sm:$0xff]
  %v748 = vld [vmem:[%s5 + $0x38] sm:$0xff]
  %v749 = vld [vmem:[%s5 + $0x40] sm:$0xff]
  %v750 = vld [vmem:[%s5 + $0x48] sm:$0xff]
  %v751 = vld [vmem:[%s5 + $0x50] sm:$0xff]
  %v752 = vld [vmem:[%s5 + $0x58] sm:$0xff]
  %v753 = vld [vmem:[%s5 + $0x60] sm:$0xff]
  %v754 = vld [vmem:[%s5 + $0x68] sm:$0xff]
  %v755 = vld [vmem:[%s5 + $0x70] sm:$0xff]
  %v756 = vld [vmem:[%s5 + $0x78] sm:$0xff]
  %757 = vmatprep.subr.mxu0 0.0
  %758 = vmatpush1.msra.mxu0 %v741
  %759 = vmatprep.subr.mxu0 0.0
  %760 = vmatpush1.msra.mxu0 %v742
  %761 = vmatprep.subr.mxu0 0.0
  %762 = vmatpush1.msra.mxu0 %v743
  %763 = vmatprep.subr.mxu0 0.0
  %764 = vmatpush1.msra.mxu0 %v744
  %765 = vmatprep.subr.mxu0 0.0
  %766 = vmatpush1.msra.mxu0 %v745
  %767 = vmatprep.subr.mxu0 0.0
  %768 = vmatpush1.msra.mxu0 %v746
  %769 = vmatprep.subr.mxu0 0.0
  %770 = vmatpush1.msra.mxu0 %v747
  %771 = vmatprep.subr.mxu0 0.0
  %772 = vmatpush1.msra.mxu0 %v748
  %773 = vmatprep.subr.mxu0 0.0
  %774 = vmatpush1.msra.mxu0 %v749
  %775 = vmatprep.subr.mxu0 0.0
  %776 = vmatpush1.msra.mxu0 %v750
  %777 = vmatprep.subr.mxu0 0.0
  %778 = vmatpush1.msra.mxu0 %v751
  %779 = vmatprep.subr.mxu0 0.0
  %780 = vmatpush1.msra.mxu0 %v752
  %781 = vmatprep.subr.mxu0 0.0
  %782 = vmatpush1.msra.mxu0 %v753
  %783 = vmatprep.subr.mxu0 0.0
  %784 = vmatpush1.msra.mxu0 %v754
  %785 = vmatprep.subr.mxu0 0.0
  %786 = vmatpush1.msra.mxu0 %v755
  %787 = vmatprep.subr.mxu0 0.0
  %788 = vmatpush1.msra.mxu0 %v756
  %789 = vmatprep.subr.mxu0 0.0
  %790 = vmatpush1.msra.mxu0 0.0
  %791 = vmatprep.subr.mxu0 0.0
  %792 = vmatpush1.msra.mxu0 0.0
  %793 = vmatprep.subr.mxu0 0.0
  %794 = vmatpush1.msra.mxu0 0.0
  %795 = vmatprep.subr.mxu0 0.0
  %796 = vmatpush1.msra.mxu0 0.0
  %797 = vmatprep.subr.mxu0 0.0
  %798 = vmatpush1.msra.mxu0 0.0
  %799 = vmatprep.subr.mxu0 0.0
  %800 = vmatpush1.msra.mxu0 0.0
  %801 = vmatprep.subr.mxu0 0.0
  %802 = vmatpush1.msra.mxu0 0.0
  %803 = vmatprep.subr.mxu0 0.0
  %804 = vmatpush1.msra.mxu0 0.0
  %805 = vmatprep.subr.mxu0 0.0
  %806 = vmatpush1.msra.mxu0 0.0
  %807 = vmatprep.subr.mxu0 0.0
  %808 = vmatpush1.msra.mxu0 0.0
  %809 = vmatprep.subr.mxu0 0.0
  %810 = vmatpush1.msra.mxu0 0.0
  %811 = vmatprep.subr.mxu0 0.0
  %812 = vmatpush1.msra.mxu0 0.0
  %813 = vmatprep.subr.mxu0 0.0
  %814 = vmatpush1.msra.mxu0 0.0
  %815 = vmatprep.subr.mxu0 0.0
  %816 = vmatpush1.msra.mxu0 0.0
  %817 = vmatprep.subr.mxu0 0.0
  %818 = vmatpush1.msra.mxu0 0.0
  %819 = vmatprep.subr.mxu0 0.0
  %820 = vmatpush1.msra.mxu0 0.0
  %821 = vmatprep.mubr.f32.mxu0 0.0
  %822 = vmatmul.mubr.f32.gmra.mrb[0].mxu0 %v737
  %v823 = vpop.f32.mrb[0].mxu0
  %v824 = vadd.f32 0.0, %v823
  %v825 = vpop.f32.mrb[0].mxu0
  %826 = vmatprep.mubr.f32.mxu0 0.0
  %827 = vmatmul.mubr.f32.gmra.mrb[0].mxu0 %v738
  %v828 = vpop.f32.mrb[0].mxu0
  %v829 = vadd.f32 0.0, %v828
  %v830 = vpop.f32.mrb[0].mxu0
  %831 = vmatprep.mubr.f32.mxu0 0.0
  %832 = vmatmul.mubr.f32.gmra.mrb[0].mxu0 %v739
  %v833 = vpop.f32.mrb[0].mxu0
  %v834 = vadd.f32 0.0, %v833
  %v835 = vpop.f32.mrb[0].mxu0
  %836 = vmatprep.mubr.f32.mxu0 0.0
  %837 = vmatmul.mubr.f32.gmra.mrb[0].mxu0 %v740
  %v838 = vpop.f32.mrb[0].mxu0
  %v839 = vadd.f32 0.0, %v838
  %v840 = vpop.f32.mrb[0].mxu0
  %841 = vdwg.mxu0
  %v842 = vld [vmem:[%s6] sm:$0xff]
  %v843 = vld [vmem:[%s6 + $0x8] sm:$0xff]
  %v844 = vld [vmem:[%s6 + $0x10] sm:$0xff]
  %v845 = vld [vmem:[%s6 + $0x18] sm:$0xff]
  %v846 = vld [vmem:[%s6 + $0x20] sm:$0xff]
  %v847 = vld [vmem:[%s6 + $0x28] sm:$0xff]
  %v848 = vld [vmem:[%s6 + $0x30] sm:$0xff]
  %v849 = vld [vmem:[%s6 + $0x38] sm:$0xff]
  %v850 = vld [vmem:[%s6 + $0x40] sm:$0xff]
  %v851 = vld [vmem:[%s6 + $0x48] sm:$0xff]
  %v852 = vld [vmem:[%s6 + $0x50] sm:$0xff]
  %v853 = vld [vmem:[%s6 + $0x58] sm:$0xff]
  %v854 = vld [vmem:[%s6 + $0x60] sm:$0xff]
  %v855 = vld [vmem:[%s6 + $0x68] sm:$0xff]
  %v856 = vld [vmem:[%s6 + $0x70] sm:$0xff]
  %v857 = vld [vmem:[%s6 + $0x78] sm:$0xff]
  %858 = vmatprep.subr.mxu0 0.0
  %859 = vmatpush1.msra.mxu0 %v842
  %860 = vmatprep.subr.mxu0 0.0
  %861 = vmatpush1.msra.mxu0 %v843
  %862 = vmatprep.subr.mxu0 0.0
  %863 = vmatpush1.msra.mxu0 %v844
  %864 = vmatprep.subr.mxu0 0.0
  %865 = vmatpush1.msra.mxu0 %v845
  %866 = vmatprep.subr.mxu0 0.0
  %867 = vmatpush1.msra.mxu0 %v846
  %868 = vmatprep.subr.mxu0 0.0
  %869 = vmatpush1.msra.mxu0 %v847
  %870 = vmatprep.subr.mxu0 0.0
  %871 = vmatpush1.msra.mxu0 %v848
  %872 = vmatprep.subr.mxu0 0.0
  %873 = vmatpush1.msra.mxu0 %v849
  %874 = vmatprep.subr.mxu0 0.0
  %875 = vmatpush1.msra.mxu0 %v850
  %876 = vmatprep.subr.mxu0 0.0
  %877 = vmatpush1.msra.mxu0 %v851
  %878 = vmatprep.subr.mxu0 0.0
  %879 = vmatpush1.msra.mxu0 %v852
  %880 = vmatprep.subr.mxu0 0.0
  %881 = vmatpush1.msra.mxu0 %v853
  %882 = vmatprep.subr.mxu0 0.0
  %883 = vmatpush1.msra.mxu0 %v854
  %884 = vmatprep.subr.mxu0 0.0
  %885 = vmatpush1.msra.mxu0 %v855
  %886 = vmatprep.subr.mxu0 0.0
  %887 = vmatpush1.msra.mxu0 %v856
  %888 = vmatprep.subr.mxu0 0.0
  %889 = vmatpush1.msra.mxu0 %v857
  %890 = vmatprep.subr.mxu0 0.0
  %891 = vmatpush1.msra.mxu0 0.0
  %892 = vmatprep.subr.mxu0 0.0
  %893 = vmatpush1.msra.mxu0 0.0
  %894 = vmatprep.subr.mxu0 0.0
  %895 = vmatpush1.msra.mxu0 0.0
  %896 = vmatprep.subr.mxu0 0.0
  %897 = vmatpush1.msra.mxu0 0.0
  %898 = vmatprep.subr.mxu0 0.0
  %899 = vmatpush1.msra.mxu0 0.0
  %900 = vmatprep.subr.mxu0 0.0
  %901 = vmatpush1.msra.mxu0 0.0
  %902 = vmatprep.subr.mxu0 0.0
  %903 = vmatpush1.msra.mxu0 0.0
  %904 = vmatprep.subr.mxu0 0.0
  %905 = vmatpush1.msra.mxu0 0.0
  %906 = vmatprep.subr.mxu0 0.0
  %907 = vmatpush1.msra.mxu0 0.0
  %908 = vmatprep.subr.mxu0 0.0
  %909 = vmatpush1.msra.mxu0 0.0
  %910 = vmatprep.subr.mxu0 0.0
  %911 = vmatpush1.msra.mxu0 0.0
  %912 = vmatprep.subr.mxu0 0.0
  %913 = vmatpush1.msra.mxu0 0.0
  %914 = vmatprep.subr.mxu0 0.0
  %915 = vmatpush1.msra.mxu0 0.0
  %916 = vmatprep.subr.mxu0 0.0
  %917 = vmatpush1.msra.mxu0 0.0
  %918 = vmatprep.subr.mxu0 0.0
  %919 = vmatpush1.msra.mxu0 0.0
  %920 = vmatprep.subr.mxu0 0.0
  %921 = vmatpush1.msra.mxu0 0.0
  %922 = vmatprep.mubr.f32.mxu0 0.0
  %923 = vmatmul.mubr.f32.gmra.mrb[0].mxu0 %v737
  %v924 = vpop.f32.mrb[0].mxu0
  %v925 = vadd.f32 0.0, %v924
  %v926 = vpop.f32.mrb[0].mxu0
  %927 = vmatprep.mubr.f32.mxu0 0.0
  %928 = vmatmul.mubr.f32.gmra.mrb[0].mxu0 %v738
  %v929 = vpop.f32.mrb[0].mxu0
  %v930 = vadd.f32 0.0, %v929
  %v931 = vpop.f32.mrb[0].mxu0
  %932 = vmatprep.mubr.f32.mxu0 0.0
  %933 = vmatmul.mubr.f32.gmra.mrb[0].mxu0 %v739
  %v934 = vpop.f32.mrb[0].mxu0
  %v935 = vadd.f32 0.0, %v934
  %v936 = vpop.f32.mrb[0].mxu0
  %937 = vmatprep.mubr.f32.mxu0 0.0
  %938 = vmatmul.mubr.f32.gmra.mrb[0].mxu0 %v740
  %v939 = vpop.f32.mrb[0].mxu0
  %v940 = vadd.f32 0.0, %v939
  %v941 = vpop.f32.mrb[0].mxu0
  %942 = vdwg.mxu0
  %v943 = vmax.f32 %v824, %v925
  %v944 = vmax.f32 %v829, %v930
  %v945 = vmax.f32 %v834, %v935
  %v946 = vmax.f32 %v839, %v940
  %947 = vst.msk [vmem:[%s8] sm:$0xff] %vm538, %v943
  %948 = vst.msk [vmem:[%s8 + $0x8] sm:$0xff] %vm538, %v944
  %949 = vst.msk [vmem:[%s8 + $0x10] sm:$0xff] %vm538, %v945
  %950 = vst.msk [vmem:[%s8 + $0x18] sm:$0xff] %vm538, %v946
  // Predicated region
  $region30: #{perceptual_loss.6} parent=0 // pred_check
    _
  $region31: #{perceptual_loss.6} parent=0 // pred_check_branch
    %952 = sbr.rel (0) target = $region33
  $region32: #{perceptual_loss.6} parent=0 // pred_region
    _
  $region33: #{perceptual_loss.6} parent=0 // pred_fallthru
    _
  // Predicated region
  $region34: #{perceptual_loss.6} parent=0 // pred_check
    _
  $region35: #{perceptual_loss.6} parent=0 // pred_check_branch
    %954 = sbr.rel (0) target = $region37
  $region36: #{perceptual_loss.6} parent=0 // pred_region
    _
  $region37: #{perceptual_loss.6} parent=0 // pred_fallthru
    _
  // Predicated region
  $region38: #{perceptual_loss.6} parent=0 // pred_check
    _
  $region39: #{perceptual_loss.6} parent=0 // pred_check_branch
    %956 = sbr.rel (0) target = $region41
  $region40: #{perceptual_loss.6} parent=0 // pred_region
    _
  $region41: #{perceptual_loss.6} parent=0 // pred_fallthru
    _
  // Predicated region
  $region42: #{perceptual_loss.6} parent=0 // pred_check
    _
  $region43: #{perceptual_loss.6} parent=0 // pred_check_branch
    %958 = sbr.rel (0) target = $region45
  $region44: #{perceptual_loss.6} parent=0 // pred_region
    _
  $region45: #{perceptual_loss.6} parent=0 // pred_fallthru
    _

// kernel: tile.22
$region0: #{tile.22}
  #allocation0 [shape = 's32[1]{0}', space=sflag, size = 0x4, scoped, tag = 'scoped memory for tile.22']
  %s0 = inlined_call_operand.vmem [shape: f32[16], index: 0, kind: input, shape index: {}]
  %s1 = inlined_call_operand.vmem [shape: f32[8,16], index: 1, kind: output, shape index: {}]
  // Predicated region
  $region2: #{tile.22} parent=0 // pred_check
    _
  $region3: #{tile.22} parent=0 // pred_check_branch
    %3 = sbr.rel (0) target = $region5
  $region4: #{tile.22} parent=0 // pred_region
    _
  $region5: #{tile.22} parent=0 // pred_fallthru
    _
  %v4 = vld [vmem:[%s0] ss:$0 sm:$0xff]
  %5 = vst [vmem:[%s1] sm:$0xff] %v4

// kernel: tile.23
$region0: #{tile.23}
  %s0 = inlined_call_operand.vmem [shape: f32[8,16], index: 0, kind: input, shape index: {}]
  %s1 = inlined_call_operand.vmem [shape: f32[1,128], index: 1, kind: output, shape index: {}]
  $region1: #{tile.23} parent=0
    #allocation0 [shape = 'u8[4096]{0}', space=vmem, size = 0x1000, scoped, tag = 'scoped mem for output reshape']
    %v2 = vld [vmem:[%s0] sm:$0x1]
    %vm3 = vcmask 130048
    %4 = vst.msk [vmem:[#allocation0] sm:$0x1] %vm3, %v2
    %s5 = scalar_lea.vmem %s0, 7
    %v6 = vld [vmem:[%s5] sm:$0x1]
    %7 = vrot.lane.b32.xlu0 %v6, 112
    %v8 = vpop.permute.xlu0 %7
    %vm9 = vcmask 1048448
    %10 = vst.msk [vmem:[#allocation0] sm:$0x1] %vm9, %v8
    %s11 = scalar_lea.vmem %s0, 6
    %v12 = vld [vmem:[%s11] sm:$0x1]
    %13 = vrot.lane.b32.xlu0 %v12, 96
    %v14 = vpop.permute.xlu0 %13
    %vm15 = vcmask 917248
    %16 = vst.msk [vmem:[#allocation0] sm:$0x1] %vm15, %v14
    %s17 = scalar_lea.vmem %s0, 5
    %v18 = vld [vmem:[%s17] sm:$0x1]
    %19 = vrot.lane.b32.xlu0 %v18, 80
    %v20 = vpop.permute.xlu0 %19
    %vm21 = vcmask 786048
    %22 = vst.msk [vmem:[#allocation0] sm:$0x1] %vm21, %v20
    %s23 = scalar_lea.vmem %s0, 4
    %v24 = vld [vmem:[%s23] sm:$0x1]
    %25 = vrot.lane.b32.xlu0 %v24, 64
    %v26 = vpop.permute.xlu0 %25
    %vm27 = vcmask 654848
    %28 = vst.msk [vmem:[#allocation0] sm:$0x1] %vm27, %v26
    %s29 = scalar_lea.vmem %s0, 3
    %v30 = vld [vmem:[%s29] sm:$0x1]
    %31 = vrot.lane.b32.xlu0 %v30, 48
    %v32 = vpop.permute.xlu0 %31
    %vm33 = vcmask 523648
    %34 = vst.msk [vmem:[#allocation0] sm:$0x1] %vm33, %v32
    %s35 = scalar_lea.vmem %s0, 2
    %v36 = vld [vmem:[%s35] sm:$0x1]
    %37 = vrot.lane.b32.xlu0 %v36, 32
    %v38 = vpop.permute.xlu0 %37
    %vm39 = vcmask 392448
    %40 = vst.msk [vmem:[#allocation0] sm:$0x1] %vm39, %v38
    %s41 = scalar_lea.vmem %s0, 1
    %v42 = vld [vmem:[%s41] sm:$0x1]
    %43 = vrot.lane.b32.xlu0 %v42, 16
    %v44 = vpop.permute.xlu0 %43
    %vm45 = vcmask 261248
    %46 = vst.msk [vmem:[#allocation0] sm:$0x1] %vm45, %v44
    %s48 = sshllo.u32 0, 1
    %v50 = vld [vmem:[#allocation0] sm:%s48]
    %s51 = sshllo.u32 0, 1
    %52 = vst [vmem:[%s1] sm:%s51] %v50

// kernel: perceptual_loss.7
$region0: #{perceptual_loss.7}
  #allocation0 [shape = 'u32[]', space=smem, size = 0x4, offset = 0x4, fixed_abs, tag = 'smem constant byte address 0x4 - core index']
  #allocation1 [shape = 'u32[144,128]{1,0:T(1,128)}', space=vmem, size = 0x12000, scoped, tag = 'internal scratch']
  %s0 = inlined_call_operand.vmem [shape: bf16[32,256], index: 0, kind: input, shape index: {}]
  %s1 = inlined_call_operand.vmem [shape: bf16[256,128], index: 1, kind: input, shape index: {}]
  %s2 = inlined_call_operand.vmem [shape: f32[1,128], index: 2, kind: input, shape index: {}]
  %s3 = inlined_call_operand.vmem [shape: f32[32,128], index: 3, kind: output, shape index: {}]
  %s4 = sld [smem:[#allocation0]]
  $region22: #{perceptual_loss.7} parent=0
    _
  %s6 = ssub.s32 1, %s4
  %s7 = scalar_select 0, %s6, %s4
  // Predicated region
  $region2: #{perceptual_loss.7} parent=0 // pred_check
    _
  $region3: #{perceptual_loss.7} parent=0 // pred_check_branch
    %9 = sbr.rel (0) target = $region5
  $region4: #{perceptual_loss.7} parent=0 // pred_region
    _
  $region5: #{perceptual_loss.7} parent=0 // pred_fallthru
    _
  // Predicated region
  $region6: #{perceptual_loss.7} parent=0 // pred_check
    _
  $region7: #{perceptual_loss.7} parent=0 // pred_check_branch
    %11 = sbr.rel (0) target = $region9
  $region8: #{perceptual_loss.7} parent=0 // pred_region
    _
  $region9: #{perceptual_loss.7} parent=0 // pred_fallthru
    _
  // Predicated region
  $region10: #{perceptual_loss.7} parent=0 // pred_check
    _
  $region11: #{perceptual_loss.7} parent=0 // pred_check_branch
    %13 = sbr.rel (0) target = $region13
  $region12: #{perceptual_loss.7} parent=0 // pred_region
    _
  $region13: #{perceptual_loss.7} parent=0 // pred_fallthru
    _
  %v15 = vld [vmem:[%s0] sm:$0xff]
  %v16 = vld [vmem:[%s0 + $0x8] sm:$0xff]
  %v17 = vld [vmem:[%s0 + $0x10] sm:$0xff]
  %v18 = vld [vmem:[%s0 + $0x18] sm:$0xff]
  %v19 = vld [vmem:[%s1] sm:$0xf]
  %v20 = vld [vmem:[%s1 + $0x4] sm:$0xf]
  %v21 = vld [vmem:[%s1 + $0x8] sm:$0xf]
  %v22 = vld [vmem:[%s1 + $0xc] sm:$0xf]
  %v23 = vld [vmem:[%s1 + $0x10] sm:$0xf]
  %v24 = vld [vmem:[%s1 + $0x14] sm:$0xf]
  %v25 = vld [vmem:[%s1 + $0x18] sm:$0xf]
  %v26 = vld [vmem:[%s1 + $0x1c] sm:$0xf]
  %v27 = vld [vmem:[%s1 + $0x20] sm:$0xf]
  %v28 = vld [vmem:[%s1 + $0x24] sm:$0xf]
  %v29 = vld [vmem:[%s1 + $0x28] sm:$0xf]
  %v30 = vld [vmem:[%s1 + $0x2c] sm:$0xf]
  %v31 = vld [vmem:[%s1 + $0x30] sm:$0xf]
  %v32 = vld [vmem:[%s1 + $0x34] sm:$0xf]
  %v33 = vld [vmem:[%s1 + $0x38] sm:$0xf]
  %v34 = vld [vmem:[%s1 + $0x3c] sm:$0xf]
  %v35 = vld [vmem:[%s1 + $0x40] sm:$0xf]
  %v36 = vld [vmem:[%s1 + $0x44] sm:$0xf]
  %v37 = vld [vmem:[%s1 + $0x48] sm:$0xf]
  %v38 = vld [vmem:[%s1 + $0x4c] sm:$0xf]
  %v39 = vld [vmem:[%s1 + $0x50] sm:$0xf]
  %v40 = vld [vmem:[%s1 + $0x54] sm:$0xf]
  %v41 = vld [vmem:[%s1 + $0x58] sm:$0xf]
  %v42 = vld [vmem:[%s1 + $0x5c] sm:$0xf]
  %v43 = vld [vmem:[%s1 + $0x60] sm:$0xf]
  %v44 = vld [vmem:[%s1 + $0x64] sm:$0xf]
  %v45 = vld [vmem:[%s1 + $0x68] sm:$0xf]
  %v46 = vld [vmem:[%s1 + $0x6c] sm:$0xf]
  %v47 = vld [vmem:[%s1 + $0x70] sm:$0xf]
  %v48 = vld [vmem:[%s1 + $0x74] sm:$0xf]
  %v49 = vld [vmem:[%s1 + $0x78] sm:$0xf]
  %v50 = vld [vmem:[%s1 + $0x7c] sm:$0xf]
  %v51 = vld [vmem:[%s2] sm:$0x1]
  %v53 = vlaneseq
  %v54 = vshrl.u32 %v53, 7
  %v55 = vsub.s32 0, %v54
  %v56 = vrot.slane %v51, %v55
  %v62 = vunpack.c.l.b16 %v15
  %v63 = vunpack.c.h.b16 %v15
  %v64 = vunpack.c.l.b16 %v16
  %v65 = vunpack.c.h.b16 %v16
  %v66 = vunpack.c.l.b16 %v17
  %v67 = vunpack.c.h.b16 %v17
  %v68 = vunpack.c.l.b16 %v18
  %v69 = vunpack.c.h.b16 %v18
  %v70 = vpack.c.b16 %v64, %v62
  %v71 = vpack.c.b16 %v65, %v63
  %v72 = vpack.c.b16 %v68, %v66
  %v73 = vpack.c.b16 %v69, %v67
  %v110 = vunpack.c.l.b16 %v19
  %v111 = vunpack.c.l.b16 %v20
  %v112 = vunpack.c.l.b16 %v21
  %v113 = vunpack.c.l.b16 %v22
  %v114 = vunpack.c.l.b16 %v23
  %v115 = vunpack.c.l.b16 %v24
  %v116 = vunpack.c.l.b16 %v25
  %v117 = vunpack.c.l.b16 %v26
  %v118 = vunpack.c.l.b16 %v27
  %v119 = vunpack.c.l.b16 %v28
  %v120 = vunpack.c.l.b16 %v29
  %v121 = vunpack.c.l.b16 %v30
  %v122 = vunpack.c.l.b16 %v31
  %v123 = vunpack.c.l.b16 %v32
  %v124 = vunpack.c.l.b16 %v33
  %v125 = vunpack.c.l.b16 %v34
  %v126 = vunpack.c.l.b16 %v35
  %v127 = vunpack.c.l.b16 %v36
  %v128 = vunpack.c.l.b16 %v37
  %v129 = vunpack.c.l.b16 %v38
  %v130 = vunpack.c.l.b16 %v39
  %v131 = vunpack.c.l.b16 %v40
  %v132 = vunpack.c.l.b16 %v41
  %v133 = vunpack.c.l.b16 %v42
  %v134 = vunpack.c.l.b16 %v43
  %v135 = vunpack.c.l.b16 %v44
  %v136 = vunpack.c.l.b16 %v45
  %v137 = vunpack.c.l.b16 %v46
  %v138 = vunpack.c.l.b16 %v47
  %v139 = vunpack.c.l.b16 %v48
  %v140 = vunpack.c.l.b16 %v49
  %v141 = vunpack.c.l.b16 %v50
  %v142 = vpack.c.b16 %v111, %v110
  %v143 = vpack.c.b16 %v113, %v112
  %v144 = vpack.c.b16 %v115, %v114
  %v145 = vpack.c.b16 %v117, %v116
  %v146 = vpack.c.b16 %v119, %v118
  %v147 = vpack.c.b16 %v121, %v120
  %v148 = vpack.c.b16 %v123, %v122
  %v149 = vpack.c.b16 %v125, %v124
  %v150 = vpack.c.b16 %v127, %v126
  %v151 = vpack.c.b16 %v129, %v128
  %v152 = vpack.c.b16 %v131, %v130
  %v153 = vpack.c.b16 %v133, %v132
  %v154 = vpack.c.b16 %v135, %v134
  %v155 = vpack.c.b16 %v137, %v136
  %v156 = vpack.c.b16 %v139, %v138
  %v157 = vpack.c.b16 %v141, %v140
  %174 = vmatprep.subr.bf16.mxu0 0
  %175 = vmatpush1.bf16.msra.mxu0 %v142
  %176 = vmatprep.subr.bf16.mxu0 0
  %177 = vmatpush1.bf16.msra.mxu0 %v143
  %178 = vmatprep.subr.bf16.mxu0 0
  %179 = vmatpush1.bf16.msra.mxu0 %v144
  %180 = vmatprep.subr.bf16.mxu0 0
  %181 = vmatpush1.bf16.msra.mxu0 %v145
  %182 = vmatprep.subr.bf16.mxu0 0
  %183 = vmatpush1.bf16.msra.mxu0 %v146
  %184 = vmatprep.subr.bf16.mxu0 0
  %185 = vmatpush1.bf16.msra.mxu0 %v147
  %186 = vmatprep.subr.bf16.mxu0 0
  %187 = vmatpush1.bf16.msra.mxu0 %v148
  %188 = vmatprep.subr.bf16.mxu0 0
  %189 = vmatpush1.bf16.msra.mxu0 %v149
  %190 = vmatprep.subr.bf16.mxu0 0
  %191 = vmatpush1.bf16.msra.mxu0 %v150
  %192 = vmatprep.subr.bf16.mxu0 0
  %193 = vmatpush1.bf16.msra.mxu0 %v151
  %194 = vmatprep.subr.bf16.mxu0 0
  %195 = vmatpush1.bf16.msra.mxu0 %v152
  %196 = vmatprep.subr.bf16.mxu0 0
  %197 = vmatpush1.bf16.msra.mxu0 %v153
  %198 = vmatprep.subr.bf16.mxu0 0
  %199 = vmatpush1.bf16.msra.mxu0 %v154
  %200 = vmatprep.subr.bf16.mxu0 0
  %201 = vmatpush1.bf16.msra.mxu0 %v155
  %202 = vmatprep.subr.bf16.mxu0 0
  %203 = vmatpush1.bf16.msra.mxu0 %v156
  %204 = vmatprep.subr.bf16.mxu0 0
  %205 = vmatpush1.bf16.msra.mxu0 %v157
  %206 = vmatprep.mubr.bf16.mxu0 %v71
  %207 = vmatmul.mubr.bf16.gmra.mrb[0].mxu0 %v70
  %v208 = vpop.f32.mrb[0].mxu0
  %v209 = vadd.f32 %v56, %v208
  %v210 = vpop.f32.mrb[0].mxu0
  %v211 = vpop.f32.mrb[0].mxu0
  %v212 = vadd.f32 %v56, %v211
  %v213 = vpop.f32.mrb[0].mxu0
  %214 = vmatprep.mubr.bf16.mxu0 %v73
  %215 = vmatmul.mubr.bf16.gmra.mrb[0].mxu0 %v72
  %v216 = vpop.f32.mrb[0].mxu0
  %v217 = vadd.f32 %v56, %v216
  %v218 = vpop.f32.mrb[0].mxu0
  %v219 = vpop.f32.mrb[0].mxu0
  %v220 = vadd.f32 %v56, %v219
  %v221 = vpop.f32.mrb[0].mxu0
  %222 = vdwg.mxu0
  %v223 = vmax.f32 %v209, 0.0
  %v224 = vmax.f32 %v212, 0.0
  %v225 = vmax.f32 %v217, 0.0
  %v226 = vmax.f32 %v220, 0.0
  %227 = vst [vmem:[%s3] sm:$0xff] %v223
  %228 = vst [vmem:[%s3 + $0x8] sm:$0xff] %v224
  %229 = vst [vmem:[%s3 + $0x10] sm:$0xff] %v225
  %230 = vst [vmem:[%s3 + $0x18] sm:$0xff] %v226
  // Predicated region
  $region14: #{perceptual_loss.7} parent=0 // pred_check
    _
  $region15: #{perceptual_loss.7} parent=0 // pred_check_branch
    %232 = sbr.rel (0) target = $region17
  $region16: #{perceptual_loss.7} parent=0 // pred_region
    _
  $region17: #{perceptual_loss.7} parent=0 // pred_fallthru
    _
  // Predicated region
  $region18: #{perceptual_loss.7} parent=0 // pred_check
    _
  $region19: #{perceptual_loss.7} parent=0 // pred_check_branch
    %234 = sbr.rel (0) target = $region21
  $region20: #{perceptual_loss.7} parent=0 // pred_region
    _
  $region21: #{perceptual_loss.7} parent=0 // pred_fallthru
    _

// kernel: perceptual_loss.9
$region0: #{perceptual_loss.9}
  #allocation0 [shape = 'u32[]', space=smem, size = 0x4, offset = 0x4, fixed_abs, tag = 'smem constant byte address 0x4 - core index']
  #allocation1 [shape = 'u32[144,128]{1,0:T(1,128)}', space=vmem, size = 0x12000, scoped, tag = 'internal scratch']
  #allocation2 [shape = 'f32[1,1]{1,0:T(1,128)}', space=smem, size = 0x200, scoped, tag = 'scratch operand']
  %s0 = inlined_call_operand.vmem [shape: f32[32,128], index: 0, kind: input, shape index: {}, may-alias: {0,1}]
  %s1 = inlined_call_operand.vmem [shape: f32[32,128], index: 1, kind: input, shape index: {}, may-alias: {0,1}]
  %s2 = inlined_call_operand.hbm [shape: f32[1,1], index: 2, kind: output, shape index: {}]
  %s3 = sld [smem:[#allocation0]]
  $region26: #{perceptual_loss.9} parent=0
    _
  %s5 = ssub.s32 1, %s3
  %s6 = scalar_select 0, %s5, %s3
  $region1: #{perceptual_loss.9} parent=0
    #allocation3 [shape = 'u8[512]{0}', space=smem, size = 0x200, scoped, tag = 'output window, operand 0, single buffered']
    #allocation4 [shape = 's32[1]{0}', space=sflag, size = 0x4, scoped, tag = 'scoped memory for perceptual_loss.9']
    %7 = vsyncpa [#allocation4], 0
    // Predicated region
    $region2: #{perceptual_loss.9} parent=1 // pred_check
      _
    $region3: #{perceptual_loss.9} parent=1 // pred_check_branch
      %9 = sbr.rel (0) target = $region5
    $region4: #{perceptual_loss.9} parent=1 // pred_region
      _
    $region5: #{perceptual_loss.9} parent=1 // pred_fallthru
      _
    // Predicated region
    $region6: #{perceptual_loss.9} parent=1 // pred_check
      _
    $region7: #{perceptual_loss.9} parent=1 // pred_check_branch
      %11 = sbr.rel (0) target = $region9
    $region8: #{perceptual_loss.9} parent=1 // pred_region
      %s12 = sadd.s32 0, 1
      %s13 = smul.u32 2, %s12
      %p14 = scmp.lt.s32.totalorder %s13, 3
      %s15 = scalar_select %p14, %s13, 3
      %s16 = smul.addr %s15, 8
      %s17 = scalar_lea.vmem %s1, %s16
      %s18 = sadd.s32 0, 1
      %s19 = smul.u32 2, %s18
    $region9: #{perceptual_loss.9} parent=1 // pred_fallthru
      _
    %s20 = sadd.s32 0, 1
    %s21 = smul.u32 2, %s20
    %p22 = scmp.lt.s32.totalorder %s21, 3
    %s23 = scalar_select %p22, %s21, 3
    %s24 = smul.addr %s23, 8
    %s25 = scalar_lea.vmem %s1, %s24
    %s26 = sadd.s32 0, 1
    %s27 = smul.u32 2, %s26
    %p28 = scmp.lt.s32.totalorder %s27, 3
    %s29 = scalar_select %p28, %s27, 3
    %s30 = smul.addr %s29, 8
    %s31 = scalar_lea.vmem %s1, %s30
    %s32 = sadd.s32 0, 1
    %s33 = smul.u32 2, %s32
    %p34 = scmp.eq.s32.totalorder 0, 0
    // Predicated region
    $region10: #{perceptual_loss.9} parent=1 // pred_check
      %p35 = pneg %p34
    $region11: #{perceptual_loss.9} parent=1 // pred_check_branch
      %37 = sbr.rel (%p35) target = $region13
    $region12: #{perceptual_loss.9} parent=1 // pred_region
      %s38 = scalar_lea.smem [#allocation2], 0
      %39 = sst [smem:[%s38]] 0.0
    $region13: #{perceptual_loss.9} parent=1 // pred_fallthru
      _
    %v40 = vld [vmem:[%s0] sm:$0xff]
    %v41 = vld [vmem:[%s0 + $0x8] sm:$0xff]
    %v42 = vld [vmem:[%s31] sm:$0xff]
    %v43 = vld [vmem:[%s31 + $0x8] sm:$0xff]
    %v44 = vsub.f32 %v40, %v42
    %v45 = vsub.f32 %v41, %v43
    %s46 = sld [smem:[#allocation2]]
    %v47 = vmul.f32 %v44, %v44
    %v48 = vmul.f32 %v45, %v45
    %v49 = vadd.f32 %v47, %v48
    %50 = vadd.xlane.f32.xlu0 %v49
    %v51 = vpop.xlane.xlu0 %50
    %v52 = vrot.slane %v51, 4
    %v53 = vadd.f32 %v51, %v52
    %v54 = vrot.slane %v53, 2
    %v55 = vadd.f32 %v53, %v54
    %v56 = vrot.slane %v55, 1
    %v57 = vadd.f32 %v55, %v56
    %s58 = vtos %v57
    %s59 = sadd.f32 %s46, %s58
    %s60 = scalar_lea.smem [#allocation2], 0
    %61 = sst [smem:[%s60]] %s59
    // Predicated region
    $region14: #{perceptual_loss.9} parent=1 // pred_check
      %p62 = pneg %p34
    $region15: #{perceptual_loss.9} parent=1 // pred_check_branch
      %64 = sbr.rel (%p62) target = $region17
    $region16: #{perceptual_loss.9} parent=1 // pred_region
      %s65 = sld [smem:[#allocation2]]
      %s66 = smul.f32 %s65, 0.00048828125
      %s67 = scalar_lea.smem [#allocation3], 0
      %68 = sst [smem:[%s67]] %s66
    $region17: #{perceptual_loss.9} parent=1 // pred_fallthru
      _
    // Predicated region
    $region18: #{perceptual_loss.9} parent=1 // pred_check
      _
    $region19: #{perceptual_loss.9} parent=1 // pred_check_branch
      %70 = sbr.rel (0) target = $region21
    $region20: #{perceptual_loss.9} parent=1 // pred_region
      %s72 = ssub.s32 16, 16
      %73 = vsyncadd [#allocation4], %s72
      %76 = dma.smem_to_hbm [#allocation3], 16, %s2, [#allocation4]
    $region21: #{perceptual_loss.9} parent=1 // pred_fallthru
      _
    // Predicated region
    $region22: #{perceptual_loss.9} parent=1 // pred_check
      _
    $region23: #{perceptual_loss.9} parent=1 // pred_check_branch
      %78 = sbr.rel (0) target = $region25
    $region24: #{perceptual_loss.9} parent=1 // pred_region
      %79 = dma.done [#allocation4], 16
    $region25: #{perceptual_loss.9} parent=1 // pred_fallthru
      _
    %80 = sfence
    %81 = vsyncpa [#allocation4], 1

</llo_original>
